<compile_context>
chip_gen: v6e
topology: v6e:2x2x1
jax: 0.10.0
libtpu: 0.0.40
codegen_flags: <defaults>
</compile_context>

<pallas_src>
import functools

import jax
import jax.numpy as jnp
from jax import lax
from jax.experimental import pallas as pl
from jax.experimental.pallas import tpu as pltpu


_VMEM_LIMIT = 48 * 1024 * 1024       # leaves headroom on v7x (64 MiB / TC)
_TILE_BUDGET = 6 * 1024 * 1024       # per streamed input buffer (x2 double-buffer)


def _choose_tp(P, row_bytes):
    """Largest spatial tile (multiple of 128, divides P) under the VMEM budget."""
    for tp in (2048, 1024, 512, 256, 128):
        if P % tp == 0 and row_bytes * tp <= _TILE_BUDGET:
            return tp
    for tp in (128, 256, 512):
        if P % tp == 0:
            return tp
    return P


# ----------------------------- Conv3d (3x3x3, s=1, p=1) -----------------------------

def _conv_kernel(p_ref, w_ref, b_ref, o_ref):
    # p_ref: (27*Cin, TP)  w_ref: (Cout, 27*Cin)  b_ref: (Cout, 1)  o_ref: (Cout, TP)
    y = jnp.dot(w_ref[...], p_ref[...], preferred_element_type=jnp.float32)
    o_ref[...] = (y + b_ref[...]).astype(o_ref.dtype)


def _conv_stats_kernel(p_ref, w_ref, b_ref, o_ref, ssum_ref, ssq_ref):
    # Same as _conv_kernel, plus GroupNorm stats epilogue (per-channel sum / sumsq
    # over this P tile) so GN never needs a second full read of the activation.
    y = jnp.dot(w_ref[...], p_ref[...], preferred_element_type=jnp.float32)
    y = y + b_ref[...]
    o_ref[...] = y.astype(o_ref.dtype)
    ssum_ref[...] = jnp.sum(y, axis=1, keepdims=True)
    ssq_ref[...] = jnp.sum(y * y, axis=1, keepdims=True)


def _im2col27(x):
    # x: (N, C, D, H, W) -> (N, 27*C, D*H*W), tap-major / channel-minor ordering.
    N, C, D, H, W = x.shape
    xp = jnp.pad(x, ((0, 0), (0, 0), (1, 1), (1, 1), (1, 1)))
    cols = []
    for kd in range(3):
        for kh in range(3):
            for kw in range(3):
                cols.append(
                    xp[:, :, kd:kd + D, kh:kh + H, kw:kw + W].reshape(N, C, D * H * W))
    return jnp.concatenate(cols, axis=1)


def conv3d_pallas(x_ncdhw, w, b, *, with_stats=False, mxu_dtype=None):
    """3x3x3 conv, stride 1, padding 1.  x: (N,Cin,D,H,W), w: (3,3,3,Cin,Cout).

    Returns conv output in (N, Cout, P) layout; if with_stats also returns
    per-P-tile per-channel (sum, sum-of-squares) for the following GroupNorm.
    """
    N, Cin, D, H, W = x_ncdhw.shape
    Cout = w.shape[-1]
    P = D * H * W
    K = 27 * Cin

    cdt = jnp.dtype(mxu_dtype) if mxu_dtype is not None else x_ncdhw.dtype
    patches = _im2col27(x_ncdhw).astype(cdt)                 # (N, K, P) -- XLA glue
    wk = jnp.transpose(w.reshape(K, Cout)).astype(cdt)       # (Cout, K), stays resident
    bk = b.reshape(Cout, 1).astype(jnp.float32)

    tp = _choose_tp(P, K * jnp.dtype(cdt).itemsize)
    npt = P // tp
    out_dtype = x_ncdhw.dtype

    kernel = _conv_stats_kernel if with_stats else _conv_kernel
    out_shape = [jax.ShapeDtypeStruct((N, Cout, P), out_dtype)]
    out_specs = [pl.BlockSpec((None, Cout, tp), lambda n, p: (n, 0, p))]
    if with_stats:
        out_shape += [jax.ShapeDtypeStruct((N, npt, Cout, 1), jnp.float32)] * 2
        out_specs += [pl.BlockSpec((None, None, Cout, 1),
                                   lambda n, p: (n, p, 0, 0))] * 2

    res = pl.pallas_call(
        kernel,
        out_shape=tuple(out_shape),
        grid=(N, npt),
        in_specs=[
            pl.BlockSpec((None, K, tp), lambda n, p: (n, 0, p)),   # streamed patches
            pl.BlockSpec((Cout, K), lambda n, p: (0, 0)),          # resident weights
            pl.BlockSpec((Cout, 1), lambda n, p: (0, 0)),          # resident bias
        ],
        out_specs=tuple(out_specs),
        compiler_params=pltpu.CompilerParams(
            dimension_semantics=("parallel", "parallel"),
            vmem_limit_bytes=_VMEM_LIMIT),
    )(patches, wk, bk)
    return res if with_stats else res[0]


# -------------------- GroupNorm scale/shift from conv-epilogue stats --------------------

def _gn_scale_shift(ssum, ssq, gamma, beta, num_groups, P, eps=1e-6):
    # ssum/ssq: (N, npt, C, 1).  Tiny XLA glue on (N, C)-sized arrays.
    N, _, C, _ = ssum.shape
    cs = jnp.sum(ssum, axis=(1, 3))                              # (N, C)
    cq = jnp.sum(ssq, axis=(1, 3))                               # (N, C)
    G = num_groups
    cg = C // G
    cnt = float(P * cg)
    g_mean = cs.reshape(N, G, cg).sum(axis=2) / cnt              # (N, G)
    g_msq = cq.reshape(N, G, cg).sum(axis=2) / cnt
    g_var = jnp.maximum(g_msq - g_mean * g_mean, 0.0)            # clamp: avoid rsqrt(neg)
    inv = lax.rsqrt(g_var + eps)                                 # (N, G)
    inv_c = jnp.repeat(inv, cg, axis=1)                          # (N, C)
    mean_c = jnp.repeat(g_mean, cg, axis=1)
    a = inv_c * gamma[None, :]                                   # folded gamma*rsqrt
    bsh = beta[None, :] - mean_c * a
    return (a.reshape(N, C, 1).astype(jnp.float32),
            bsh.reshape(N, C, 1).astype(jnp.float32))


# ----------------------------- Fused scale + ReLU (+ residual) -----------------------------

def _scale_relu_kernel(x_ref, a_ref, b_ref, o_ref):
    y = x_ref[...].astype(jnp.float32) * a_ref[...] + b_ref[...]
    o_ref[...] = jnp.maximum(y, 0.0).astype(o_ref.dtype)


def _scale_relu_add_kernel(x_ref, a_ref, b_ref, r_ref, o_ref):
    y = jnp.maximum(x_ref[...].astype(jnp.float32) * a_ref[...] + b_ref[...], 0.0)
    o_ref[...] = (y + r_ref[...].astype(jnp.float32)).astype(o_ref.dtype)


def scale_relu_pallas(x_ncp, a, b, residual=None):
    """y = relu(x * a + b) [+ residual], all in (N, C, P) layout, P-tiled."""
    N, C, P = x_ncp.shape
    nstream = 3 if residual is not None else 2
    tp = _choose_tp(P, C * x_ncp.dtype.itemsize * nstream)
    npt = P // tp

    in_specs = [
        pl.BlockSpec((None, C, tp), lambda n, p: (n, 0, p)),
        pl.BlockSpec((None, C, 1), lambda n, p: (n, 0, 0)),
        pl.BlockSpec((None, C, 1), lambda n, p: (n, 0, 0)),
    ]
    args = [x_ncp, a, b]
    kernel = _scale_relu_kernel
    if residual is not None:
        in_specs.append(pl.BlockSpec((None, C, tp), lambda n, p: (n, 0, p)))
        args.append(residual)
        kernel = _scale_relu_add_kernel

    return pl.pallas_call(
        kernel,
        out_shape=jax.ShapeDtypeStruct((N, C, P), x_ncp.dtype),
        grid=(N, npt),
        in_specs=in_specs,
        out_specs=pl.BlockSpec((None, C, tp), lambda n, p: (n, 0, p)),
        compiler_params=pltpu.CompilerParams(
            dimension_semantics=("parallel", "parallel"),
            vmem_limit_bytes=_VMEM_LIMIT),
    )(*args)


# ----------------------------- Module forward -----------------------------

def init_params(key, cin, cout):
    ks = jax.random.split(key, 6)

    def conv_w(k, ci, co):
        fan_in = ci * 27
        return jax.random.normal(k, (3, 3, 3, ci, co), jnp.float32) / jnp.sqrt(fan_in)

    p = {
        "w1": conv_w(ks[0], cin, cout),
        "b1": 0.01 * jax.random.normal(ks[1], (cout,), jnp.float32),
        "w2": conv_w(ks[2], cout, cout),
        "b2": 0.01 * jax.random.normal(ks[3], (cout,), jnp.float32),
        "gamma1": jnp.ones((cout,), jnp.float32),
        "beta1": jnp.zeros((cout,), jnp.float32),
        "gamma2": jnp.ones((cout,), jnp.float32),
        "beta2": jnp.zeros((cout,), jnp.float32),
    }
    if cin != cout:
        p["ws"] = conv_w(ks[4], cin, cout)     # use_conv_shortcut=True -> 3x3x3 conv
        p["bs"] = 0.01 * jax.random.normal(ks[5], (cout,), jnp.float32)
    return p


def resnet_block3d_forward(x_ncdhw, params, in_channels, out_channels, *,
                           mxu_dtype=None, eps=1e-6):
    """Forward pass of ResNet_block3D (eval mode).  x: (N, Cin, D, H, W) -> (N, Cout, D, H, W).

    Set mxu_dtype=jnp.bfloat16 for bf16 MXU operands on v6e/v7x (f32 accumulation).
    """
    N, Cin, D, H, W = x_ncdhw.shape
    P = D * H * W
    num_groups = out_channels // 4 if out_channels <= 32 else 32   # matches Normalize()

    # conv1 (+ GroupNorm stats computed in the conv epilogue)
    h1, s1, q1 = conv3d_pallas(x_ncdhw, params["w1"], params["b1"],
                               with_stats=True, mxu_dtype=mxu_dtype)
    # TODO(synk): nn.Dropout(0.5) is identity in eval mode; training-mode stochastic
    # masking with torch-equivalent RNG is not implemented.
    a1, b1 = _gn_scale_shift(s1, q1, params["gamma1"], params["beta1"],
                             num_groups, P, eps)
    h1 = scale_relu_pallas(h1, a1, b1)                              # norm1 + relu fused

    # conv2 (+ stats)
    h2, s2, q2 = conv3d_pallas(h1.reshape(N, out_channels, D, H, W),
                               params["w2"], params["b2"],
                               with_stats=True, mxu_dtype=mxu_dtype)
    a2, b2 = _gn_scale_shift(s2, q2, params["gamma2"], params["beta2"],
                             num_groups, P, eps)

    # shortcut (use_conv_shortcut=True -> 3x3x3 conv when channel count changes)
    if in_channels != out_channels:
        sc = conv3d_pallas(x_ncdhw, params["ws"], params["bs"],
                           with_stats=False, mxu_dtype=mxu_dtype)
    else:
        sc = x_ncdhw.reshape(N, in_channels, P)

    out = scale_relu_pallas(h2, a2, b2, residual=sc)                # norm2+relu+add fused
    return out.reshape(N, out_channels, D, H, W)                    # already NCDHW


if __name__ == "__main__":
    key = jax.random.PRNGKey(0)
    kx, kp = jax.random.split(key)
    N, Cin, Cout, D, H, W = 2, 4, 8, 8, 8, 8
    x = jax.random.normal(kx, (N, Cin, D, H, W), jnp.float32)
    params = init_params(kp, Cin, Cout)

    fwd = jax.jit(resnet_block3d_forward, static_argnums=(2, 3))
    y = jax.block_until_ready(fwd(x, params, Cin, Cout))

    assert y.shape == (N, Cout, D, H, W) and y.dtype == jnp.float32
    assert bool(jnp.all(jnp.isfinite(y)))
    print("KERNEL_OK")
</pallas_src>

<mosaic_0001>
module attributes {stable_mosaic.version = 11 : i64} {
  func.func @_conv_kernel(%arg0: i32, %arg1: i32, %arg2: memref<1x108x512xf32, #tpu.memory_space<vmem>>, %arg3: memref<8x108xf32, #tpu.memory_space<vmem>>, %arg4: memref<8x1xf32, #tpu.memory_space<vmem>>, %arg5: memref<1x8x512xf32, #tpu.memory_space<vmem>>) attributes {dimension_semantics = [#tpu.dimension_semantics<parallel>, #tpu.dimension_semantics<parallel>], iteration_bounds = array<i64: 2, 1>, scalar_prefetch = 0 : i64, scratch_operands = 0 : i64, tpu.core_type = #tpu.core_type<tc>, window_params = [{transform_indices = @transform_0, window_bounds = array<i64: 1, 108, 512>}, {pipeline_mode = #tpu.pipeline_mode<synchronous>, transform_indices = @transform_1, window_bounds = array<i64: 8, 108>}, {pipeline_mode = #tpu.pipeline_mode<synchronous>, transform_indices = @transform_2, window_bounds = array<i64: 8, 1>}, {transform_indices = @transform_3, window_bounds = array<i64: 1, 8, 512>}]} {
    %c0 = arith.constant 0 : index
    %c0_0 = arith.constant 0 : index
    %0 = vector.load %arg3[%c0, %c0_0] : memref<8x108xf32, #tpu.memory_space<vmem>>, vector<8x108xf32>
    %c0_1 = arith.constant 0 : index
    %c0_2 = arith.constant 0 : index
    %c0_3 = arith.constant 0 : index
    %1 = vector.load %arg2[%c0_1, %c0_2, %c0_3] : memref<1x108x512xf32, #tpu.memory_space<vmem>>, vector<1x108x512xf32>
    %2 = vector.shape_cast %1 : vector<1x108x512xf32> to vector<108x512xf32>
    %cst = arith.constant dense<0.000000e+00> : vector<8x512xf32>
    %3 = tpu.matmul %0, %2, %cst {dimension_numbers = #tpu.dot_dimension_numbers<[1], [0], [0], [1], [0, 0, 1, 1], [], []>} : vector<8x108xf32>, vector<108x512xf32>, vector<8x512xf32> -> vector<8x512xf32>
    %c0_4 = arith.constant 0 : index
    %c0_5 = arith.constant 0 : index
    %4 = vector.load %arg4[%c0_4, %c0_5] : memref<8x1xf32, #tpu.memory_space<vmem>>, vector<8x1xf32>
    %5 = vector.broadcast %4 : vector<8x1xf32> to vector<8x512xf32>
    %6 = arith.addf %3, %5 : vector<8x512xf32>
    %c0_6 = arith.constant 0 : index
    %c0_7 = arith.constant 0 : index
    %c0_8 = arith.constant 0 : index
    %7 = vector.load %arg5[%c0_6, %c0_7, %c0_8] : memref<1x8x512xf32, #tpu.memory_space<vmem>>, vector<1x8x512xf32>
    %8 = vector.shape_cast %7 : vector<1x8x512xf32> to vector<8x512xf32>
    %9 = vector.shape_cast %6 : vector<8x512xf32> to vector<1x8x512xf32>
    tpu.vector_store %arg5[%c0_6, %c0_7, %c0_8], %9 {strides = array<i32>} : memref<1x8x512xf32, #tpu.memory_space<vmem>>, vector<1x8x512xf32>,
    return
  }
  func.func @transform_0(%arg0: i32, %arg1: i32) -> (i32, i32, i32) {
    %c0_i32 = arith.constant 0 : i32
    %c0_i32_0 = arith.constant 0 : i32
    return %arg0, %c0_i32, %arg1 : i32, i32, i32
  }
  func.func @transform_1(%arg0: i32, %arg1: i32) -> (i32, i32) {
    %c0_i32 = arith.constant 0 : i32
    %c0_i32_0 = arith.constant 0 : i32
    %c0_i32_1 = arith.constant 0 : i32
    return %c0_i32, %c0_i32_0 : i32, i32
  }
  func.func @transform_2(%arg0: i32, %arg1: i32) -> (i32, i32) {
    %c0_i32 = arith.constant 0 : i32
    %c0_i32_0 = arith.constant 0 : i32
    %c0_i32_1 = arith.constant 0 : i32
    return %c0_i32, %c0_i32_0 : i32, i32
  }
  func.func @transform_3(%arg0: i32, %arg1: i32) -> (i32, i32, i32) {
    %c0_i32 = arith.constant 0 : i32
    %c0_i32_0 = arith.constant 0 : i32
    return %arg0, %c0_i32, %arg1 : i32, i32, i32
  }
}

module attributes {stable_mosaic.version = 11 : i64} {
  func.func @_conv_stats_kernel(%arg0: i32, %arg1: i32, %arg2: memref<1x108x512xf32, #tpu.memory_space<vmem>>, %arg3: memref<8x108xf32, #tpu.memory_space<vmem>>, %arg4: memref<8x1xf32, #tpu.memory_space<vmem>>, %arg5: memref<1x8x512xf32, #tpu.memory_space<vmem>>, %arg6: memref<1x1x8x1xf32, #tpu.memory_space<vmem>>, %arg7: memref<1x1x8x1xf32, #tpu.memory_space<vmem>>) attributes {dimension_semantics = [#tpu.dimension_semantics<parallel>, #tpu.dimension_semantics<parallel>], iteration_bounds = array<i64: 2, 1>, scalar_prefetch = 0 : i64, scratch_operands = 0 : i64, tpu.core_type = #tpu.core_type<tc>, window_params = [{transform_indices = @transform_0, window_bounds = array<i64: 1, 108, 512>}, {pipeline_mode = #tpu.pipeline_mode<synchronous>, transform_indices = @transform_1, window_bounds = array<i64: 8, 108>}, {pipeline_mode = #tpu.pipeline_mode<synchronous>, transform_indices = @transform_2, window_bounds = array<i64: 8, 1>}, {transform_indices = @transform_3, window_bounds = array<i64: 1, 8, 512>}, {transform_indices = @transform_4, window_bounds = array<i64: 1, 1, 8, 1>}, {transform_indices = @transform_5, window_bounds = array<i64: 1, 1, 8, 1>}]} {
    %c0 = arith.constant 0 : index
    %c0_0 = arith.constant 0 : index
    %0 = vector.load %arg3[%c0, %c0_0] : memref<8x108xf32, #tpu.memory_space<vmem>>, vector<8x108xf32>
    %c0_1 = arith.constant 0 : index
    %c0_2 = arith.constant 0 : index
    %c0_3 = arith.constant 0 : index
    %1 = vector.load %arg2[%c0_1, %c0_2, %c0_3] : memref<1x108x512xf32, #tpu.memory_space<vmem>>, vector<1x108x512xf32>
    %2 = vector.shape_cast %1 : vector<1x108x512xf32> to vector<108x512xf32>
    %cst = arith.constant dense<0.000000e+00> : vector<8x512xf32>
    %3 = tpu.matmul %0, %2, %cst {dimension_numbers = #tpu.dot_dimension_numbers<[1], [0], [0], [1], [0, 0, 1, 1], [], []>} : vector<8x108xf32>, vector<108x512xf32>, vector<8x512xf32> -> vector<8x512xf32>
    %c0_4 = arith.constant 0 : index
    %c0_5 = arith.constant 0 : index
    %4 = vector.load %arg4[%c0_4, %c0_5] : memref<8x1xf32, #tpu.memory_space<vmem>>, vector<8x1xf32>
    %5 = vector.broadcast %4 : vector<8x1xf32> to vector<8x512xf32>
    %6 = arith.addf %3, %5 : vector<8x512xf32>
    %c0_6 = arith.constant 0 : index
    %c0_7 = arith.constant 0 : index
    %c0_8 = arith.constant 0 : index
    %7 = vector.load %arg5[%c0_6, %c0_7, %c0_8] : memref<1x8x512xf32, #tpu.memory_space<vmem>>, vector<1x8x512xf32>
    %8 = vector.shape_cast %7 : vector<1x8x512xf32> to vector<8x512xf32>
    %9 = vector.shape_cast %6 : vector<8x512xf32> to vector<1x8x512xf32>
    tpu.vector_store %arg5[%c0_6, %c0_7, %c0_8], %9 {strides = array<i32>} : memref<1x8x512xf32, #tpu.memory_space<vmem>>, vector<1x8x512xf32>,
    %cst_9 = arith.constant dense<0.000000e+00> : vector<8xf32>
    %10 = vector.multi_reduction <add>, %6, %cst_9 [1] : vector<8x512xf32> to vector<8xf32>
    %11 = vector.shape_cast %10 : vector<8xf32> to vector<8x1xf32>
    %c0_10 = arith.constant 0 : index
    %c0_11 = arith.constant 0 : index
    %c0_12 = arith.constant 0 : index
    %c0_13 = arith.constant 0 : index
    %12 = vector.load %arg6[%c0_10, %c0_11, %c0_12, %c0_13] : memref<1x1x8x1xf32, #tpu.memory_space<vmem>>, vector<1x1x8x1xf32>
    %13 = vector.shape_cast %12 : vector<1x1x8x1xf32> to vector<8x1xf32>
    %14 = vector.shape_cast %11 : vector<8x1xf32> to vector<1x1x8x1xf32>
    tpu.vector_store %arg6[%c0_10, %c0_11, %c0_12, %c0_13], %14 {strides = array<i32>} : memref<1x1x8x1xf32, #tpu.memory_space<vmem>>, vector<1x1x8x1xf32>,
    %15 = arith.mulf %6, %6 : vector<8x512xf32>
    %cst_14 = arith.constant dense<0.000000e+00> : vector<8xf32>
    %16 = vector.multi_reduction <add>, %15, %cst_14 [1] : vector<8x512xf32> to vector<8xf32>
    %17 = vector.shape_cast %16 : vector<8xf32> to vector<8x1xf32>
    %c0_15 = arith.constant 0 : index
    %c0_16 = arith.constant 0 : index
    %c0_17 = arith.constant 0 : index
    %c0_18 = arith.constant 0 : index
    %18 = vector.load %arg7[%c0_15, %c0_16, %c0_17, %c0_18] : memref<1x1x8x1xf32, #tpu.memory_space<vmem>>, vector<1x1x8x1xf32>
    %19 = vector.shape_cast %18 : vector<1x1x8x1xf32> to vector<8x1xf32>
    %20 = vector.shape_cast %17 : vector<8x1xf32> to vector<1x1x8x1xf32>
    tpu.vector_store %arg7[%c0_15, %c0_16, %c0_17, %c0_18], %20 {strides = array<i32>} : memref<1x1x8x1xf32, #tpu.memory_space<vmem>>, vector<1x1x8x1xf32>,
    return
  }
  func.func @transform_0(%arg0: i32, %arg1: i32) -> (i32, i32, i32) {
    %c0_i32 = arith.constant 0 : i32
    %c0_i32_0 = arith.constant 0 : i32
    return %arg0, %c0_i32, %arg1 : i32, i32, i32
  }
  func.func @transform_1(%arg0: i32, %arg1: i32) -> (i32, i32) {
    %c0_i32 = arith.constant 0 : i32
    %c0_i32_0 = arith.constant 0 : i32
    %c0_i32_1 = arith.constant 0 : i32
    return %c0_i32, %c0_i32_0 : i32, i32
  }
  func.func @transform_2(%arg0: i32, %arg1: i32) -> (i32, i32) {
    %c0_i32 = arith.constant 0 : i32
    %c0_i32_0 = arith.constant 0 : i32
    %c0_i32_1 = arith.constant 0 : i32
    return %c0_i32, %c0_i32_0 : i32, i32
  }
  func.func @transform_3(%arg0: i32, %arg1: i32) -> (i32, i32, i32) {
    %c0_i32 = arith.constant 0 : i32
    %c0_i32_0 = arith.constant 0 : i32
    return %arg0, %c0_i32, %arg1 : i32, i32, i32
  }
  func.func @transform_4(%arg0: i32, %arg1: i32) -> (i32, i32, i32, i32) {
    %c0_i32 = arith.constant 0 : i32
    %c0_i32_0 = arith.constant 0 : i32
    %c0_i32_1 = arith.constant 0 : i32
    return %arg0, %arg1, %c0_i32, %c0_i32_0 : i32, i32, i32, i32
  }
  func.func @transform_5(%arg0: i32, %arg1: i32) -> (i32, i32, i32, i32) {
    %c0_i32 = arith.constant 0 : i32
    %c0_i32_0 = arith.constant 0 : i32
    %c0_i32_1 = arith.constant 0 : i32
    return %arg0, %arg1, %c0_i32, %c0_i32_0 : i32, i32, i32, i32
  }
}

module attributes {stable_mosaic.version = 11 : i64} {
  func.func @_scale_relu_kernel(%arg0: i32, %arg1: i32, %arg2: memref<1x8x512xf32, #tpu.memory_space<vmem>>, %arg3: memref<1x8x1xf32, #tpu.memory_space<vmem>>, %arg4: memref<1x8x1xf32, #tpu.memory_space<vmem>>, %arg5: memref<1x8x512xf32, #tpu.memory_space<vmem>>) attributes {dimension_semantics = [#tpu.dimension_semantics<parallel>, #tpu.dimension_semantics<parallel>], iteration_bounds = array<i64: 2, 1>, scalar_prefetch = 0 : i64, scratch_operands = 0 : i64, tpu.core_type = #tpu.core_type<tc>, window_params = [{transform_indices = @transform_0, window_bounds = array<i64: 1, 8, 512>}, {transform_indices = @transform_1, window_bounds = array<i64: 1, 8, 1>}, {transform_indices = @transform_2, window_bounds = array<i64: 1, 8, 1>}, {transform_indices = @transform_3, window_bounds = array<i64: 1, 8, 512>}]} {
    %c0 = arith.constant 0 : index
    %c0_0 = arith.constant 0 : index
    %c0_1 = arith.constant 0 : index
    %0 = vector.load %arg2[%c0, %c0_0, %c0_1] : memref<1x8x512xf32, #tpu.memory_space<vmem>>, vector<1x8x512xf32>
    %1 = vector.shape_cast %0 : vector<1x8x512xf32> to vector<8x512xf32>
    %c0_2 = arith.constant 0 : index
    %c0_3 = arith.constant 0 : index
    %c0_4 = arith.constant 0 : index
    %2 = vector.load %arg3[%c0_2, %c0_3, %c0_4] : memref<1x8x1xf32, #tpu.memory_space<vmem>>, vector<1x8x1xf32>
    %3 = vector.shape_cast %2 : vector<1x8x1xf32> to vector<8x1xf32>
    %4 = vector.broadcast %3 : vector<8x1xf32> to vector<8x512xf32>
    %5 = arith.mulf %1, %4 : vector<8x512xf32>
    %c0_5 = arith.constant 0 : index
    %c0_6 = arith.constant 0 : index
    %c0_7 = arith.constant 0 : index
    %6 = vector.load %arg4[%c0_5, %c0_6, %c0_7] : memref<1x8x1xf32, #tpu.memory_space<vmem>>, vector<1x8x1xf32>
    %7 = vector.shape_cast %6 : vector<1x8x1xf32> to vector<8x1xf32>
    %8 = vector.broadcast %7 : vector<8x1xf32> to vector<8x512xf32>
    %9 = arith.addf %5, %8 : vector<8x512xf32>
    %cst = arith.constant 0.000000e+00 : f32
    %10 = vector.broadcast %cst : f32 to vector<8x512xf32>
    %11 = arith.maximumf %9, %10 : vector<8x512xf32>
    %c0_8 = arith.constant 0 : index
    %c0_9 = arith.constant 0 : index
    %c0_10 = arith.constant 0 : index
    %12 = vector.load %arg5[%c0_8, %c0_9, %c0_10] : memref<1x8x512xf32, #tpu.memory_space<vmem>>, vector<1x8x512xf32>
    %13 = vector.shape_cast %12 : vector<1x8x512xf32> to vector<8x512xf32>
    %14 = vector.shape_cast %11 : vector<8x512xf32> to vector<1x8x512xf32>
    tpu.vector_store %arg5[%c0_8, %c0_9, %c0_10], %14 {strides = array<i32>} : memref<1x8x512xf32, #tpu.memory_space<vmem>>, vector<1x8x512xf32>,
    return
  }
  func.func @transform_0(%arg0: i32, %arg1: i32) -> (i32, i32, i32) {
    %c0_i32 = arith.constant 0 : i32
    %c0_i32_0 = arith.constant 0 : i32
    return %arg0, %c0_i32, %arg1 : i32, i32, i32
  }
  func.func @transform_1(%arg0: i32, %arg1: i32) -> (i32, i32, i32) {
    %c0_i32 = arith.constant 0 : i32
    %c0_i32_0 = arith.constant 0 : i32
    %c0_i32_1 = arith.constant 0 : i32
    return %arg0, %c0_i32, %c0_i32_0 : i32, i32, i32
  }
  func.func @transform_2(%arg0: i32, %arg1: i32) -> (i32, i32, i32) {
    %c0_i32 = arith.constant 0 : i32
    %c0_i32_0 = arith.constant 0 : i32
    %c0_i32_1 = arith.constant 0 : i32
    return %arg0, %c0_i32, %c0_i32_0 : i32, i32, i32
  }
  func.func @transform_3(%arg0: i32, %arg1: i32) -> (i32, i32, i32) {
    %c0_i32 = arith.constant 0 : i32
    %c0_i32_0 = arith.constant 0 : i32
    return %arg0, %c0_i32, %arg1 : i32, i32, i32
  }
}

module attributes {stable_mosaic.version = 11 : i64} {
  func.func @_scale_relu_add_kernel(%arg0: i32, %arg1: i32, %arg2: memref<1x8x512xf32, #tpu.memory_space<vmem>>, %arg3: memref<1x8x1xf32, #tpu.memory_space<vmem>>, %arg4: memref<1x8x1xf32, #tpu.memory_space<vmem>>, %arg5: memref<1x8x512xf32, #tpu.memory_space<vmem>>, %arg6: memref<1x8x512xf32, #tpu.memory_space<vmem>>) attributes {dimension_semantics = [#tpu.dimension_semantics<parallel>, #tpu.dimension_semantics<parallel>], iteration_bounds = array<i64: 2, 1>, scalar_prefetch = 0 : i64, scratch_operands = 0 : i64, tpu.core_type = #tpu.core_type<tc>, window_params = [{transform_indices = @transform_0, window_bounds = array<i64: 1, 8, 512>}, {transform_indices = @transform_1, window_bounds = array<i64: 1, 8, 1>}, {transform_indices = @transform_2, window_bounds = array<i64: 1, 8, 1>}, {transform_indices = @transform_3, window_bounds = array<i64: 1, 8, 512>}, {transform_indices = @transform_4, window_bounds = array<i64: 1, 8, 512>}]} {
    %c0 = arith.constant 0 : index
    %c0_0 = arith.constant 0 : index
    %c0_1 = arith.constant 0 : index
    %0 = vector.load %arg2[%c0, %c0_0, %c0_1] : memref<1x8x512xf32, #tpu.memory_space<vmem>>, vector<1x8x512xf32>
    %1 = vector.shape_cast %0 : vector<1x8x512xf32> to vector<8x512xf32>
    %c0_2 = arith.constant 0 : index
    %c0_3 = arith.constant 0 : index
    %c0_4 = arith.constant 0 : index
    %2 = vector.load %arg3[%c0_2, %c0_3, %c0_4] : memref<1x8x1xf32, #tpu.memory_space<vmem>>, vector<1x8x1xf32>
    %3 = vector.shape_cast %2 : vector<1x8x1xf32> to vector<8x1xf32>
    %4 = vector.broadcast %3 : vector<8x1xf32> to vector<8x512xf32>
    %5 = arith.mulf %1, %4 : vector<8x512xf32>
    %c0_5 = arith.constant 0 : index
    %c0_6 = arith.constant 0 : index
    %c0_7 = arith.constant 0 : index
    %6 = vector.load %arg4[%c0_5, %c0_6, %c0_7] : memref<1x8x1xf32, #tpu.memory_space<vmem>>, vector<1x8x1xf32>
    %7 = vector.shape_cast %6 : vector<1x8x1xf32> to vector<8x1xf32>
    %8 = vector.broadcast %7 : vector<8x1xf32> to vector<8x512xf32>
    %9 = arith.addf %5, %8 : vector<8x512xf32>
    %cst = arith.constant 0.000000e+00 : f32
    %10 = vector.broadcast %cst : f32 to vector<8x512xf32>
    %11 = arith.maximumf %9, %10 : vector<8x512xf32>
    %c0_8 = arith.constant 0 : index
    %c0_9 = arith.constant 0 : index
    %c0_10 = arith.constant 0 : index
    %12 = vector.load %arg5[%c0_8, %c0_9, %c0_10] : memref<1x8x512xf32, #tpu.memory_space<vmem>>, vector<1x8x512xf32>
    %13 = vector.shape_cast %12 : vector<1x8x512xf32> to vector<8x512xf32>
    %14 = arith.addf %11, %13 : vector<8x512xf32>
    %c0_11 = arith.constant 0 : index
    %c0_12 = arith.constant 0 : index
    %c0_13 = arith.constant 0 : index
    %15 = vector.load %arg6[%c0_11, %c0_12, %c0_13] : memref<1x8x512xf32, #tpu.memory_space<vmem>>, vector<1x8x512xf32>
    %16 = vector.shape_cast %15 : vector<1x8x512xf32> to vector<8x512xf32>
    %17 = vector.shape_cast %14 : vector<8x512xf32> to vector<1x8x512xf32>
    tpu.vector_store %arg6[%c0_11, %c0_12, %c0_13], %17 {strides = array<i32>} : memref<1x8x512xf32, #tpu.memory_space<vmem>>, vector<1x8x512xf32>,
    return
  }
  func.func @transform_0(%arg0: i32, %arg1: i32) -> (i32, i32, i32) {
    %c0_i32 = arith.constant 0 : i32
    %c0_i32_0 = arith.constant 0 : i32
    return %arg0, %c0_i32, %arg1 : i32, i32, i32
  }
  func.func @transform_1(%arg0: i32, %arg1: i32) -> (i32, i32, i32) {
    %c0_i32 = arith.constant 0 : i32
    %c0_i32_0 = arith.constant 0 : i32
    %c0_i32_1 = arith.constant 0 : i32
    return %arg0, %c0_i32, %c0_i32_0 : i32, i32, i32
  }
  func.func @transform_2(%arg0: i32, %arg1: i32) -> (i32, i32, i32) {
    %c0_i32 = arith.constant 0 : i32
    %c0_i32_0 = arith.constant 0 : i32
    %c0_i32_1 = arith.constant 0 : i32
    return %arg0, %c0_i32, %c0_i32_0 : i32, i32, i32
  }
  func.func @transform_3(%arg0: i32, %arg1: i32) -> (i32, i32, i32) {
    %c0_i32 = arith.constant 0 : i32
    %c0_i32_0 = arith.constant 0 : i32
    return %arg0, %c0_i32, %arg1 : i32, i32, i32
  }
  func.func @transform_4(%arg0: i32, %arg1: i32) -> (i32, i32, i32) {
    %c0_i32 = arith.constant 0 : i32
    %c0_i32_0 = arith.constant 0 : i32
    return %arg0, %c0_i32, %arg1 : i32, i32, i32
  }
}

module attributes {stable_mosaic.version = 11 : i64} {
  func.func @_conv_stats_kernel(%arg0: i32, %arg1: i32, %arg2: memref<1x216x512xf32, #tpu.memory_space<vmem>>, %arg3: memref<8x216xf32, #tpu.memory_space<vmem>>, %arg4: memref<8x1xf32, #tpu.memory_space<vmem>>, %arg5: memref<1x8x512xf32, #tpu.memory_space<vmem>>, %arg6: memref<1x1x8x1xf32, #tpu.memory_space<vmem>>, %arg7: memref<1x1x8x1xf32, #tpu.memory_space<vmem>>) attributes {dimension_semantics = [#tpu.dimension_semantics<parallel>, #tpu.dimension_semantics<parallel>], iteration_bounds = array<i64: 2, 1>, scalar_prefetch = 0 : i64, scratch_operands = 0 : i64, tpu.core_type = #tpu.core_type<tc>, window_params = [{transform_indices = @transform_0, window_bounds = array<i64: 1, 216, 512>}, {pipeline_mode = #tpu.pipeline_mode<synchronous>, transform_indices = @transform_1, window_bounds = array<i64: 8, 216>}, {pipeline_mode = #tpu.pipeline_mode<synchronous>, transform_indices = @transform_2, window_bounds = array<i64: 8, 1>}, {transform_indices = @transform_3, window_bounds = array<i64: 1, 8, 512>}, {transform_indices = @transform_4, window_bounds = array<i64: 1, 1, 8, 1>}, {transform_indices = @transform_5, window_bounds = array<i64: 1, 1, 8, 1>}]} {
    %c0 = arith.constant 0 : index
    %c0_0 = arith.constant 0 : index
    %0 = vector.load %arg3[%c0, %c0_0] : memref<8x216xf32, #tpu.memory_space<vmem>>, vector<8x216xf32>
    %c0_1 = arith.constant 0 : index
    %c0_2 = arith.constant 0 : index
    %c0_3 = arith.constant 0 : index
    %1 = vector.load %arg2[%c0_1, %c0_2, %c0_3] : memref<1x216x512xf32, #tpu.memory_space<vmem>>, vector<1x216x512xf32>
    %2 = vector.shape_cast %1 : vector<1x216x512xf32> to vector<216x512xf32>
    %cst = arith.constant dense<0.000000e+00> : vector<8x512xf32>
    %3 = tpu.matmul %0, %2, %cst {dimension_numbers = #tpu.dot_dimension_numbers<[1], [0], [0], [1], [0, 0, 1, 1], [], []>} : vector<8x216xf32>, vector<216x512xf32>, vector<8x512xf32> -> vector<8x512xf32>
    %c0_4 = arith.constant 0 : index
    %c0_5 = arith.constant 0 : index
    %4 = vector.load %arg4[%c0_4, %c0_5] : memref<8x1xf32, #tpu.memory_space<vmem>>, vector<8x1xf32>
    %5 = vector.broadcast %4 : vector<8x1xf32> to vector<8x512xf32>
    %6 = arith.addf %3, %5 : vector<8x512xf32>
    %c0_6 = arith.constant 0 : index
    %c0_7 = arith.constant 0 : index
    %c0_8 = arith.constant 0 : index
    %7 = vector.load %arg5[%c0_6, %c0_7, %c0_8] : memref<1x8x512xf32, #tpu.memory_space<vmem>>, vector<1x8x512xf32>
    %8 = vector.shape_cast %7 : vector<1x8x512xf32> to vector<8x512xf32>
    %9 = vector.shape_cast %6 : vector<8x512xf32> to vector<1x8x512xf32>
    tpu.vector_store %arg5[%c0_6, %c0_7, %c0_8], %9 {strides = array<i32>} : memref<1x8x512xf32, #tpu.memory_space<vmem>>, vector<1x8x512xf32>,
    %cst_9 = arith.constant dense<0.000000e+00> : vector<8xf32>
    %10 = vector.multi_reduction <add>, %6, %cst_9 [1] : vector<8x512xf32> to vector<8xf32>
    %11 = vector.shape_cast %10 : vector<8xf32> to vector<8x1xf32>
    %c0_10 = arith.constant 0 : index
    %c0_11 = arith.constant 0 : index
    %c0_12 = arith.constant 0 : index
    %c0_13 = arith.constant 0 : index
    %12 = vector.load %arg6[%c0_10, %c0_11, %c0_12, %c0_13] : memref<1x1x8x1xf32, #tpu.memory_space<vmem>>, vector<1x1x8x1xf32>
    %13 = vector.shape_cast %12 : vector<1x1x8x1xf32> to vector<8x1xf32>
    %14 = vector.shape_cast %11 : vector<8x1xf32> to vector<1x1x8x1xf32>
    tpu.vector_store %arg6[%c0_10, %c0_11, %c0_12, %c0_13], %14 {strides = array<i32>} : memref<1x1x8x1xf32, #tpu.memory_space<vmem>>, vector<1x1x8x1xf32>,
    %15 = arith.mulf %6, %6 : vector<8x512xf32>
    %cst_14 = arith.constant dense<0.000000e+00> : vector<8xf32>
    %16 = vector.multi_reduction <add>, %15, %cst_14 [1] : vector<8x512xf32> to vector<8xf32>
    %17 = vector.shape_cast %16 : vector<8xf32> to vector<8x1xf32>
    %c0_15 = arith.constant 0 : index
    %c0_16 = arith.constant 0 : index
    %c0_17 = arith.constant 0 : index
    %c0_18 = arith.constant 0 : index
    %18 = vector.load %arg7[%c0_15, %c0_16, %c0_17, %c0_18] : memref<1x1x8x1xf32, #tpu.memory_space<vmem>>, vector<1x1x8x1xf32>
    %19 = vector.shape_cast %18 : vector<1x1x8x1xf32> to vector<8x1xf32>
    %20 = vector.shape_cast %17 : vector<8x1xf32> to vector<1x1x8x1xf32>
    tpu.vector_store %arg7[%c0_15, %c0_16, %c0_17, %c0_18], %20 {strides = array<i32>} : memref<1x1x8x1xf32, #tpu.memory_space<vmem>>, vector<1x1x8x1xf32>,
    return
  }
  func.func @transform_0(%arg0: i32, %arg1: i32) -> (i32, i32, i32) {
    %c0_i32 = arith.constant 0 : i32
    %c0_i32_0 = arith.constant 0 : i32
    return %arg0, %c0_i32, %arg1 : i32, i32, i32
  }
  func.func @transform_1(%arg0: i32, %arg1: i32) -> (i32, i32) {
    %c0_i32 = arith.constant 0 : i32
    %c0_i32_0 = arith.constant 0 : i32
    %c0_i32_1 = arith.constant 0 : i32
    return %c0_i32, %c0_i32_0 : i32, i32
  }
  func.func @transform_2(%arg0: i32, %arg1: i32) -> (i32, i32) {
    %c0_i32 = arith.constant 0 : i32
    %c0_i32_0 = arith.constant 0 : i32
    %c0_i32_1 = arith.constant 0 : i32
    return %c0_i32, %c0_i32_0 : i32, i32
  }
  func.func @transform_3(%arg0: i32, %arg1: i32) -> (i32, i32, i32) {
    %c0_i32 = arith.constant 0 : i32
    %c0_i32_0 = arith.constant 0 : i32
    return %arg0, %c0_i32, %arg1 : i32, i32, i32
  }
  func.func @transform_4(%arg0: i32, %arg1: i32) -> (i32, i32, i32, i32) {
    %c0_i32 = arith.constant 0 : i32
    %c0_i32_0 = arith.constant 0 : i32
    %c0_i32_1 = arith.constant 0 : i32
    return %arg0, %arg1, %c0_i32, %c0_i32_0 : i32, i32, i32, i32
  }
  func.func @transform_5(%arg0: i32, %arg1: i32) -> (i32, i32, i32, i32) {
    %c0_i32 = arith.constant 0 : i32
    %c0_i32_0 = arith.constant 0 : i32
    %c0_i32_1 = arith.constant 0 : i32
    return %arg0, %arg1, %c0_i32, %c0_i32_0 : i32, i32, i32, i32
  }
}

</mosaic_0001>

<llo_original>
// kernel: resnet_block3d_forward.8
$region0: #{resnet_block3d_forward.8}
  #allocation0 [shape = 'u32[]', space=smem, size = 0x4, offset = 0x4, fixed_abs, tag = 'smem constant byte address 0x4 - core index']
  #allocation1 [shape = 'u32[144,128]{1,0:T(1,128)}', space=vmem, size = 0x12000, scoped, tag = 'internal scratch']
  %s0 = inlined_call_operand.vmem [shape: f32[2,108,512], index: 0, kind: input, shape index: {}]
  %s1 = inlined_call_operand.vmem [shape: f32[8,108], index: 1, kind: input, shape index: {}]
  %s2 = inlined_call_operand.vmem [shape: f32[8,1], index: 2, kind: input, shape index: {}]
  %s3 = inlined_call_operand.vmem [shape: f32[2,8,512], index: 3, kind: output, shape index: {}]
  %s4 = sld [smem:[#allocation0]]
  $region45: #{resnet_block3d_forward.8} parent=0
    _
  %s6 = ssub.s32 1, %s4
  %s7 = scalar_select 0, %s6, %s4
  loop: start=0, step=1, limit=4
  $region2: #{resnet_block3d_forward.8} parent=0 // loop_pre_header
    _
  $region3: #{resnet_block3d_forward.8} parent=0 // loop_header
    %s9 = sphi 0, %s13
    %p10 = scmp.ge.s32.totalorder %s9, 4
    %s16 = sphi 0, %s28
    %s17 = sphi 0, %s24
    %s18 = sphi 0, %s16
    %s19 = sphi 0, %s17
    %s20 = sphi 0, %s18
    %s21 = sphi 0, %s19
    %s33 = sphi 0, %s35
    %s36 = sphi 0, %s33
    %s37 = sphi 0, %s36
    %s53 = sphi 0, %s37
    %s57 = sphi 0, %s57
    %s59 = sphi 0, %s57
    %s60 = sphi 0, %s59
    %s74 = sphi 0, %s60
    %s78 = sphi 0, %s78
    %s80 = sphi 0, %s78
    %s81 = sphi 0, %s80
    %s95 = sphi 0, %s81
    %s103 = sphi 0, %s105
    %s106 = sphi 0, %s103
    %s107 = sphi 0, %s106
    %s123 = sphi 0, %s107
  $region4: #{resnet_block3d_forward.8} parent=0 // loop_header_branch
    %12 = sbr.rel (%p10) target = $region8
  $region5: #{resnet_block3d_forward.8} parent=0 // loop_body
    %s14 = ssub.s32 %s9, 1
    %s15 = ssub.s32 %s9, 2
    %s22 = sadd.s32 1, %s17
    %p23 = scmp.ge.s32.totalorder %s22, 1
    %s24 = scalar_select %p23, 0, %s22
    %s25 = sadd.s32 1, %s16
    %s26 = scalar_select %p23, %s25, %s16
    %p27 = scmp.ge.s32.totalorder %s26, 2
    %s28 = scalar_select %p27, 0, %s26
    %s29 = ssub.s32 %s16, %s28
    %s30 = ssub.s32 %s17, %s24
    %s31 = sor.u32 %s29, %s30
    %p32 = scmp.eq.s32.totalorder %s31, 0
    %s34 = sadd.s32 %s33, 1
    %s35 = scalar_select %p32, %s33, %s34
    %p38 = pneg %p32
    %p39 = scmp.eq.s32.totalorder %s9, 1
    %p40 = por %p38, %p39
    %p41 = scmp.ne.s32.totalorder %s33, %s36
    %p42 = scmp.eq.s32.totalorder %s9, 0
    %p43 = por %p41, %p42
    %p44 = scmp.ne.s32.totalorder %s33, %s36
    %p45 = scmp.eq.s32.totalorder %s14, 1
    %p46 = por %p44, %p45
    %p47 = scmp.ne.s32.totalorder %s36, %s37
    %p48 = scmp.eq.s32.totalorder %s14, 0
    %p49 = por %p47, %p48
    %p50 = scmp.ne.s32.totalorder %s36, %s37
    %p51 = scmp.eq.s32.totalorder %s15, 1
    %p52 = por %p50, %p51
    %p54 = scmp.ne.s32.totalorder %s37, %s53
    %p55 = scmp.eq.s32.totalorder %s15, 0
    %p56 = por %p54, %p55
    %s58 = sadd.s32 %s57, 1
    %p61 = scmp.eq.s32.totalorder %s9, 1
    %p62 = scmp.ne.s32.totalorder %s57, %s59
    %p63 = scmp.eq.s32.totalorder %s9, 0
    %p64 = por %p62, %p63
    %p65 = scmp.ne.s32.totalorder %s57, %s59
    %p66 = scmp.eq.s32.totalorder %s14, 1
    %p67 = por %p65, %p66
    %p68 = scmp.ne.s32.totalorder %s59, %s60
    %p69 = scmp.eq.s32.totalorder %s14, 0
    %p70 = por %p68, %p69
    %p71 = scmp.ne.s32.totalorder %s59, %s60
    %p72 = scmp.eq.s32.totalorder %s15, 1
    %p73 = por %p71, %p72
    %p75 = scmp.ne.s32.totalorder %s60, %s74
    %p76 = scmp.eq.s32.totalorder %s15, 0
    %p77 = por %p75, %p76
    %s79 = sadd.s32 %s78, 1
    %p82 = scmp.eq.s32.totalorder %s9, 1
    %p83 = scmp.ne.s32.totalorder %s78, %s80
    %p84 = scmp.eq.s32.totalorder %s9, 0
    %p85 = por %p83, %p84
    %p86 = scmp.ne.s32.totalorder %s78, %s80
    %p87 = scmp.eq.s32.totalorder %s14, 1
    %p88 = por %p86, %p87
    %p89 = scmp.ne.s32.totalorder %s80, %s81
    %p90 = scmp.eq.s32.totalorder %s14, 0
    %p91 = por %p89, %p90
    %p92 = scmp.ne.s32.totalorder %s80, %s81
    %p93 = scmp.eq.s32.totalorder %s15, 1
    %p94 = por %p92, %p93
    %p96 = scmp.ne.s32.totalorder %s81, %s95
    %p97 = scmp.eq.s32.totalorder %s15, 0
    %p98 = por %p96, %p97
    %s99 = ssub.s32 %s16, %s28
    %s100 = ssub.s32 %s17, %s24
    %s101 = sor.u32 %s99, %s100
    %p102 = scmp.eq.s32.totalorder %s101, 0
    %s104 = sadd.s32 %s103, 1
    %s105 = scalar_select %p102, %s103, %s104
    %p108 = pneg %p102
    %p109 = scmp.eq.s32.totalorder %s9, 1
    %p110 = por %p108, %p109
    %p111 = scmp.ne.s32.totalorder %s103, %s106
    %p112 = scmp.eq.s32.totalorder %s9, 0
    %p113 = por %p111, %p112
    %p114 = scmp.ne.s32.totalorder %s103, %s106
    %p115 = scmp.eq.s32.totalorder %s14, 1
    %p116 = por %p114, %p115
    %p117 = scmp.ne.s32.totalorder %s106, %s107
    %p118 = scmp.eq.s32.totalorder %s14, 0
    %p119 = por %p117, %p118
    %p120 = scmp.ne.s32.totalorder %s106, %s107
    %p121 = scmp.eq.s32.totalorder %s15, 1
    %p122 = por %p120, %p121
    %p124 = scmp.ne.s32.totalorder %s107, %s123
    %p125 = scmp.eq.s32.totalorder %s15, 0
    %p126 = por %p124, %p125
    %p127 = scmp.le.s32.totalorder 1, %s9
    %p128 = scmp.lt.s32.totalorder %s9, 3
    %p129 = pnand %p127, %p128
    %p130 = pneg %p129
    // Predicated region
    $region9: #{resnet_block3d_forward.8} parent=5 // pred_check
      _
    $region10: #{resnet_block3d_forward.8} parent=5 // pred_check_branch
      %132 = sbr.rel (%p129) target = $region12
    $region11: #{resnet_block3d_forward.8} parent=5 // pred_region
      %s133 = ssub.s32 %s9, 1
      // Predicated region
      $region13: #{resnet_block3d_forward.8} parent=11 // pred_check
        %p134 = pneg %p70
      $region14: #{resnet_block3d_forward.8} parent=11 // pred_check_branch
        %136 = sbr.rel (%p134) target = $region16
      $region15: #{resnet_block3d_forward.8} parent=11 // pred_region
        _
      $region16: #{resnet_block3d_forward.8} parent=11 // pred_fallthru
        _
      // Predicated region
      $region17: #{resnet_block3d_forward.8} parent=11 // pred_check
        %p137 = pneg %p91
      $region18: #{resnet_block3d_forward.8} parent=11 // pred_check_branch
        %139 = sbr.rel (%p137) target = $region20
      $region19: #{resnet_block3d_forward.8} parent=11 // pred_region
        _
      $region20: #{resnet_block3d_forward.8} parent=11 // pred_fallthru
        _
    $region12: #{resnet_block3d_forward.8} parent=5 // pred_fallthru
      _
    %p140 = scmp.lt.s32.totalorder %s9, 2
    // Predicated region
    $region21: #{resnet_block3d_forward.8} parent=5 // pred_check
      %p141 = pneg %p140
    $region22: #{resnet_block3d_forward.8} parent=5 // pred_check_branch
      %143 = sbr.rel (%p141) target = $region24
    $region23: #{resnet_block3d_forward.8} parent=5 // pred_region
      // Predicated region
      $region25: #{resnet_block3d_forward.8} parent=23 // pred_check
        %p144 = pneg %p43
      $region26: #{resnet_block3d_forward.8} parent=23 // pred_check_branch
        %146 = sbr.rel (%p144) target = $region28
      $region27: #{resnet_block3d_forward.8} parent=23 // pred_region
        %s147 = smul.u32 4, %s17
        %p148 = scmp.lt.s32.totalorder %s16, 1
        %s149 = scalar_select %p148, %s16, 1
        %p150 = scmp.lt.s32.totalorder %s147, 3
        %s151 = scalar_select %p150, %s147, 3
        %s152 = smul.addr %s149, 56
        %s153 = sadd.s32 %s151, %s152
        %s154 = smul.addr %s153, 8
        %s155 = scalar_lea.vmem %s0, %s154
        %s156 = smul.u32 4, %s17
      $region28: #{resnet_block3d_forward.8} parent=23 // pred_fallthru
        _
    $region24: #{resnet_block3d_forward.8} parent=5 // pred_fallthru
      _
    %p157 = scmp.le.s32.totalorder 1, %s9
    %p158 = scmp.lt.s32.totalorder %s9, 3
    %p159 = pnand %p157, %p158
    %p160 = pneg %p159
    // Predicated region
    $region29: #{resnet_block3d_forward.8} parent=5 // pred_check
      _
    $region30: #{resnet_block3d_forward.8} parent=5 // pred_check_branch
      %162 = sbr.rel (%p159) target = $region32
    $region31: #{resnet_block3d_forward.8} parent=5 // pred_region
      %s163 = ssub.s32 %s9, 1
      %s164 = smul.u32 4, %s19
      %p165 = scmp.lt.s32.totalorder %s18, 1
      %s166 = scalar_select %p165, %s18, 1
      %p167 = scmp.lt.s32.totalorder %s164, 3
      %s168 = scalar_select %p167, %s164, 3
      %s169 = smul.addr %s166, 56
      %s170 = sadd.s32 %s168, %s169
      %s171 = smul.addr %s170, 8
      %s172 = scalar_lea.vmem %s0, %s171
      %p173 = pneg %p49
      %p174 = pneg %p46
      %p175 = pneg %p70
      %p176 = pneg %p67
      %p177 = pneg %p91
      %p178 = pneg %p88
      %p179 = pneg %p119
      %p180 = pneg %p116
      %s181 = smul.u32 4, %s19
      %p182 = scmp.lt.s32.totalorder %s18, 1
      %s183 = scalar_select %p182, %s18, 1
      %p184 = scmp.lt.s32.totalorder %s181, 3
      %s185 = scalar_select %p184, %s181, 3
      %s186 = smul.addr %s183, 4
      %s187 = sadd.s32 %s185, %s186
      %s188 = smul.addr %s187, 8
      %s189 = scalar_lea.vmem %s3, %s188
      %s190 = smul.u32 4, %s19
      %p191 = scmp.lt.s32.totalorder %s18, 1
      %s192 = scalar_select %p191, %s18, 1
      %p193 = scmp.lt.s32.totalorder %s190, 3
      %s194 = scalar_select %p193, %s190, 3
      %s195 = smul.addr %s192, 56
      %s196 = sadd.s32 %s194, %s195
      %s197 = smul.addr %s196, 8
      %s198 = scalar_lea.vmem %s0, %s197
      %s199 = smul.u32 4, %s19
      %s200 = smul.u32 4, %s19
      %p201 = scmp.lt.s32.totalorder %s18, 1
      %s202 = scalar_select %p201, %s18, 1
      %p203 = scmp.lt.s32.totalorder %s200, 3
      %s204 = scalar_select %p203, %s200, 3
      %s205 = smul.addr %s202, 4
      %s206 = sadd.s32 %s204, %s205
      %s207 = smul.addr %s206, 8
      %s208 = scalar_lea.vmem %s3, %s207
      %s209 = smul.u32 4, %s19
      %v210 = vld [vmem:[%s1] sm:$0xff]
      %v211 = vld [vmem:[%s198] sm:$0xff]
      %v212 = vld [vmem:[%s198 + $0x8] sm:$0xff]
      %v213 = vld [vmem:[%s198 + $0x10] sm:$0xff]
      %v214 = vld [vmem:[%s198 + $0x18] sm:$0xff]
      %v215 = vld [vmem:[%s198 + $0x20] sm:$0xff]
      %v216 = vld [vmem:[%s198 + $0x28] sm:$0xff]
      %v217 = vld [vmem:[%s198 + $0x30] sm:$0xff]
      %v218 = vld [vmem:[%s198 + $0x38] sm:$0xff]
      %v219 = vld [vmem:[%s198 + $0x40] sm:$0xff]
      %v220 = vld [vmem:[%s198 + $0x48] sm:$0xff]
      %v221 = vld [vmem:[%s198 + $0x50] sm:$0xff]
      %v222 = vld [vmem:[%s198 + $0x58] sm:$0xff]
      %v223 = vld [vmem:[%s198 + $0x60] sm:$0xff]
      %v224 = vld [vmem:[%s198 + $0x68] sm:$0xff]
      %v225 = vld [vmem:[%s198 + $0x70] sm:$0xff]
      %v226 = vld [vmem:[%s198 + $0x78] sm:$0xff]
      %v227 = vld [vmem:[%s198 + $0x80] sm:$0xff]
      %v228 = vld [vmem:[%s198 + $0x88] sm:$0xff]
      %v229 = vld [vmem:[%s198 + $0x90] sm:$0xff]
      %v230 = vld [vmem:[%s198 + $0x98] sm:$0xff]
      %v231 = vld [vmem:[%s198 + $0xa0] sm:$0xff]
      %v232 = vld [vmem:[%s198 + $0xa8] sm:$0xff]
      %v233 = vld [vmem:[%s198 + $0xb0] sm:$0xff]
      %v234 = vld [vmem:[%s198 + $0xb8] sm:$0xff]
      %v235 = vld [vmem:[%s198 + $0xc0] sm:$0xff]
      %v236 = vld [vmem:[%s198 + $0xc8] sm:$0xff]
      %v237 = vld [vmem:[%s198 + $0xd0] sm:$0xff]
      %v238 = vld [vmem:[%s198 + $0xd8] sm:$0xff]
      %v239 = vld [vmem:[%s198 + $0xe0] sm:$0xff]
      %v240 = vld [vmem:[%s198 + $0xe8] sm:$0xff]
      %v241 = vld [vmem:[%s198 + $0xf0] sm:$0xff]
      %v242 = vld [vmem:[%s198 + $0xf8] sm:$0xff]
      %v243 = vld [vmem:[%s198 + $0x100] sm:$0xff]
      %v244 = vld [vmem:[%s198 + $0x108] sm:$0xff]
      %v245 = vld [vmem:[%s198 + $0x110] sm:$0xff]
      %v246 = vld [vmem:[%s198 + $0x118] sm:$0xff]
      %v247 = vld [vmem:[%s198 + $0x120] sm:$0xff]
      %v248 = vld [vmem:[%s198 + $0x128] sm:$0xff]
      %v249 = vld [vmem:[%s198 + $0x130] sm:$0xff]
      %v250 = vld [vmem:[%s198 + $0x138] sm:$0xff]
      %v251 = vld [vmem:[%s198 + $0x140] sm:$0xff]
      %v252 = vld [vmem:[%s198 + $0x148] sm:$0xff]
      %v253 = vld [vmem:[%s198 + $0x150] sm:$0xff]
      %v254 = vld [vmem:[%s198 + $0x158] sm:$0xff]
      %v255 = vld [vmem:[%s198 + $0x160] sm:$0xff]
      %v256 = vld [vmem:[%s198 + $0x168] sm:$0xff]
      %v257 = vld [vmem:[%s198 + $0x170] sm:$0xff]
      %v258 = vld [vmem:[%s198 + $0x178] sm:$0xff]
      %v259 = vld [vmem:[%s198 + $0x180] sm:$0xff]
      %v260 = vld [vmem:[%s198 + $0x188] sm:$0xff]
      %v261 = vld [vmem:[%s198 + $0x190] sm:$0xff]
      %v262 = vld [vmem:[%s198 + $0x198] sm:$0xff]
      %v263 = vld [vmem:[%s198 + $0x1a0] sm:$0xf]
      %v264 = vld [vmem:[%s198 + $0x1a8] sm:$0xf]
      %v265 = vld [vmem:[%s198 + $0x1b0] sm:$0xf]
      %v266 = vld [vmem:[%s198 + $0x1b8] sm:$0xf]
      %v267 = vld [vmem:[%s2] sm:$0xff]
      %269 = vset.pattern.permute.xlu0 0
      %270 = vperm.xlu0 %269, %v267
      %v271 = vpop.permute.xlu0 %270
      %vm273 = vcmask 883712
      %v275 = vsel %vm273, %v210, 0
      %vm277 = vcmask 1043456
      %v279 = vsel %vm277, %v263, 0
      %v282 = vsel %vm277, %v264, 0
      %v285 = vsel %vm277, %v265, 0
      %v288 = vsel %vm277, %v266, 0
      %290 = vmatprep.subr.mxu0 0.0
      %291 = vmatpush1.msra.mxu0 0.0
      %292 = vmatprep.subr.mxu0 0.0
      %293 = vmatpush1.msra.mxu0 0.0
      %294 = vmatprep.subr.mxu0 %v282
      %295 = vmatpush1.msra.mxu0 %v279
      %296 = vmatprep.subr.mxu0 %v260
      %297 = vmatpush1.msra.mxu0 %v259
      %298 = vmatprep.subr.mxu0 %v256
      %299 = vmatpush1.msra.mxu0 %v255
      %300 = vmatprep.subr.mxu0 %v252
      %301 = vmatpush1.msra.mxu0 %v251
      %302 = vmatprep.subr.mxu0 %v248
      %303 = vmatpush1.msra.mxu0 %v247
      %304 = vmatprep.subr.mxu0 %v244
      %305 = vmatpush1.msra.mxu0 %v243
      %306 = vmatprep.subr.mxu0 %v240
      %307 = vmatpush1.msra.mxu0 %v239
      %308 = vmatprep.subr.mxu0 %v236
      %309 = vmatpush1.msra.mxu0 %v235
      %310 = vmatprep.subr.mxu0 %v232
      %311 = vmatpush1.msra.mxu0 %v231
      %312 = vmatprep.subr.mxu0 %v228
      %313 = vmatpush1.msra.mxu0 %v227
      %314 = vmatprep.subr.mxu0 %v224
      %315 = vmatpush1.msra.mxu0 %v223
      %316 = vmatprep.subr.mxu0 %v220
      %317 = vmatpush1.msra.mxu0 %v219
      %318 = vmatprep.subr.mxu0 %v216
      %319 = vmatpush1.msra.mxu0 %v215
      %320 = vmatprep.subr.mxu0 %v212
      %321 = vmatpush1.msra.mxu0 %v211
      %322 = vmatprep.subr.mxu0 0.0
      %323 = vmatpush2.msra.mxu0 0.0
      %324 = vmatprep.subr.mxu0 0.0
      %325 = vmatpush2.msra.mxu0 0.0
      %326 = vmatprep.subr.mxu0 0.0
      %327 = vmatpush2.msra.mxu0 0.0
      %328 = vmatprep.subr.mxu0 0.0
      %329 = vmatpush2.msra.mxu0 0.0
      %330 = vmatprep.subr.mxu0 0.0
      %331 = vmatpush2.msra.mxu0 0.0
      %332 = vmatprep.subr.mxu0 0.0
      %333 = vmatpush2.msra.mxu0 0.0
      %334 = vmatprep.subr.mxu0 0.0
      %335 = vmatpush2.msra.mxu0 0.0
      %336 = vmatprep.subr.mxu0 0.0
      %337 = vmatpush2.msra.mxu0 0.0
      %338 = vmatprep.subr.mxu0 0.0
      %339 = vmatpush2.msra.mxu0 0.0
      %340 = vmatprep.subr.mxu0 0.0
      %341 = vmatpush2.msra.mxu0 0.0
      %342 = vmatprep.subr.mxu0 0.0
      %343 = vmatpush2.msra.mxu0 0.0
      %344 = vmatprep.subr.mxu0 0.0
      %345 = vmatpush2.msra.mxu0 0.0
      %346 = vmatprep.subr.mxu0 0.0
      %347 = vmatpush2.msra.mxu0 0.0
      %348 = vmatprep.subr.mxu0 0.0
      %349 = vmatpush2.msra.mxu0 0.0
      %350 = vmatprep.subr.mxu0 0.0
      %351 = vmatpush2.msra.mxu0 0.0
      %352 = vmatprep.subr.mxu0 0.0
      %353 = vmatpush2.msra.mxu0 0.0
      %354 = vmatprep.mubr.f32.mxu0 0.0
      %355 = vmatmul.mubr.f32.gmra.mxu0 %v275
      %v356 = vpop.f32.mrf.mxu0
      %v357 = vadd.f32 %v271, %v356
      %v358 = vpop.f32.mrf.mxu0
      %v359 = vadd.f32 %v271, %v358
      %360 = vdwg.mxu0
      %361 = vmatprep.subr.mxu0 0.0
      %362 = vmatpush1.msra.mxu0 0.0
      %363 = vmatprep.subr.mxu0 0.0
      %364 = vmatpush1.msra.mxu0 0.0
      %365 = vmatprep.subr.mxu0 %v288
      %366 = vmatpush1.msra.mxu0 %v285
      %367 = vmatprep.subr.mxu0 %v262
      %368 = vmatpush1.msra.mxu0 %v261
      %369 = vmatprep.subr.mxu0 %v258
      %370 = vmatpush1.msra.mxu0 %v257
      %371 = vmatprep.subr.mxu0 %v254
      %372 = vmatpush1.msra.mxu0 %v253
      %373 = vmatprep.subr.mxu0 %v250
      %374 = vmatpush1.msra.mxu0 %v249
      %375 = vmatprep.subr.mxu0 %v246
      %376 = vmatpush1.msra.mxu0 %v245
      %377 = vmatprep.subr.mxu0 %v242
      %378 = vmatpush1.msra.mxu0 %v241
      %379 = vmatprep.subr.mxu0 %v238
      %380 = vmatpush1.msra.mxu0 %v237
      %381 = vmatprep.subr.mxu0 %v234
      %382 = vmatpush1.msra.mxu0 %v233
      %383 = vmatprep.subr.mxu0 %v230
      %384 = vmatpush1.msra.mxu0 %v229
      %385 = vmatprep.subr.mxu0 %v226
      %386 = vmatpush1.msra.mxu0 %v225
      %387 = vmatprep.subr.mxu0 %v222
      %388 = vmatpush1.msra.mxu0 %v221
      %389 = vmatprep.subr.mxu0 %v218
      %390 = vmatpush1.msra.mxu0 %v217
      %391 = vmatprep.subr.mxu0 %v214
      %392 = vmatpush1.msra.mxu0 %v213
      %393 = vmatprep.subr.mxu0 0.0
      %394 = vmatpush2.msra.mxu0 0.0
      %395 = vmatprep.subr.mxu0 0.0
      %396 = vmatpush2.msra.mxu0 0.0
      %397 = vmatprep.subr.mxu0 0.0
      %398 = vmatpush2.msra.mxu0 0.0
      %399 = vmatprep.subr.mxu0 0.0
      %400 = vmatpush2.msra.mxu0 0.0
      %401 = vmatprep.subr.mxu0 0.0
      %402 = vmatpush2.msra.mxu0 0.0
      %403 = vmatprep.subr.mxu0 0.0
      %404 = vmatpush2.msra.mxu0 0.0
      %405 = vmatprep.subr.mxu0 0.0
      %406 = vmatpush2.msra.mxu0 0.0
      %407 = vmatprep.subr.mxu0 0.0
      %408 = vmatpush2.msra.mxu0 0.0
      %409 = vmatprep.subr.mxu0 0.0
      %410 = vmatpush2.msra.mxu0 0.0
      %411 = vmatprep.subr.mxu0 0.0
      %412 = vmatpush2.msra.mxu0 0.0
      %413 = vmatprep.subr.mxu0 0.0
      %414 = vmatpush2.msra.mxu0 0.0
      %415 = vmatprep.subr.mxu0 0.0
      %416 = vmatpush2.msra.mxu0 0.0
      %417 = vmatprep.subr.mxu0 0.0
      %418 = vmatpush2.msra.mxu0 0.0
      %419 = vmatprep.subr.mxu0 0.0
      %420 = vmatpush2.msra.mxu0 0.0
      %421 = vmatprep.subr.mxu0 0.0
      %422 = vmatpush2.msra.mxu0 0.0
      %423 = vmatprep.subr.mxu0 0.0
      %424 = vmatpush2.msra.mxu0 0.0
      %425 = vmatprep.mubr.f32.mxu0 0.0
      %426 = vmatmul.mubr.f32.gmra.mxu0 %v275
      %v427 = vpop.f32.mrf.mxu0
      %v428 = vadd.f32 %v271, %v427
      %v429 = vpop.f32.mrf.mxu0
      %v430 = vadd.f32 %v271, %v429
      %431 = vdwg.mxu0
      %432 = vst [vmem:[%s208] sm:$0xff] %v357
      %433 = vst [vmem:[%s208 + $0x8] sm:$0xff] %v359
      %434 = vst [vmem:[%s208 + $0x10] sm:$0xff] %v428
      %435 = vst [vmem:[%s208 + $0x18] sm:$0xff] %v430
      %s436 = smul.u32 4, %s19
      %p437 = scmp.lt.s32.totalorder %s18, 1
      %s438 = scalar_select %p437, %s18, 1
      %p439 = scmp.lt.s32.totalorder %s436, 3
      %s440 = scalar_select %p439, %s436, 3
      %s441 = smul.addr %s438, 4
      %s442 = sadd.s32 %s440, %s441
      %s443 = smul.addr %s442, 8
      %s444 = scalar_lea.vmem %s3, %s443
      // Predicated region
      $region33: #{resnet_block3d_forward.8} parent=31 // pred_check
        %p445 = pneg %p116
      $region34: #{resnet_block3d_forward.8} parent=31 // pred_check_branch
        %447 = sbr.rel (%p445) target = $region36
      $region35: #{resnet_block3d_forward.8} parent=31 // pred_region
        %s448 = smul.u32 4, %s19
      $region36: #{resnet_block3d_forward.8} parent=31 // pred_fallthru
        _
    $region32: #{resnet_block3d_forward.8} parent=5 // pred_fallthru
      _
    %p449 = scmp.le.s32.totalorder 2, %s9
    // Predicated region
    $region37: #{resnet_block3d_forward.8} parent=5 // pred_check
      %p450 = pneg %p449
    $region38: #{resnet_block3d_forward.8} parent=5 // pred_check_branch
      %452 = sbr.rel (%p450) target = $region40
    $region39: #{resnet_block3d_forward.8} parent=5 // pred_region
      %s453 = ssub.s32 %s9, 2
      // Predicated region
      $region41: #{resnet_block3d_forward.8} parent=39 // pred_check
        %p454 = pneg %p122
      $region42: #{resnet_block3d_forward.8} parent=39 // pred_check_branch
        %456 = sbr.rel (%p454) target = $region44
      $region43: #{resnet_block3d_forward.8} parent=39 // pred_region
        %s457 = smul.u32 4, %s21
        %p458 = scmp.lt.s32.totalorder %s20, 1
        %s459 = scalar_select %p458, %s20, 1
        %p460 = scmp.lt.s32.totalorder %s457, 3
        %s461 = scalar_select %p460, %s457, 3
        %s462 = smul.addr %s459, 4
        %s463 = sadd.s32 %s461, %s462
        %s464 = smul.addr %s463, 8
        %s465 = scalar_lea.vmem %s3, %s464
      $region44: #{resnet_block3d_forward.8} parent=39 // pred_fallthru
        _
    $region40: #{resnet_block3d_forward.8} parent=5 // pred_fallthru
      _
  $region6: #{resnet_block3d_forward.8} parent=0 // loop_footer
    %s13 = sadd.s32 1, %s9
  $region7: #{resnet_block3d_forward.8} parent=0 // loop_footer_branch
    %8 = sbr.rel target = $region3
  $region8: #{resnet_block3d_forward.8} parent=0 // loop_exit
    _

// kernel: resnet_block3d_forward.5
$region0: #{resnet_block3d_forward.5}
  #allocation0 [shape = 'u32[]', space=smem, size = 0x4, offset = 0x4, fixed_abs, tag = 'smem constant byte address 0x4 - core index']
  #allocation1 [shape = 'u32[144,128]{1,0:T(1,128)}', space=vmem, size = 0x12000, scoped, tag = 'internal scratch']
  %s0 = inlined_call_operand.vmem [shape: f32[2,108,512], index: 0, kind: input, shape index: {}]
  %s1 = inlined_call_operand.vmem [shape: f32[8,108], index: 1, kind: input, shape index: {}]
  %s2 = inlined_call_operand.vmem [shape: f32[8,1], index: 2, kind: input, shape index: {}]
  %s3 = inlined_call_operand.vmem [shape: f32[2,8,512], index: 3, kind: output, shape index: {0}]
  %s4 = inlined_call_operand.vmem [shape: f32[2,1,8,1], index: 4, kind: output, shape index: {1}]
  %s5 = inlined_call_operand.vmem [shape: f32[2,1,8,1], index: 5, kind: output, shape index: {2}]
  %6 = xla_tuple %s3, %s4, %s5
  %s7 = sld [smem:[#allocation0]]
  $region61: #{resnet_block3d_forward.5} parent=0
    _
  %s9 = ssub.s32 1, %s7
  %s10 = scalar_select 0, %s9, %s7
  loop: start=0, step=1, limit=4
  $region2: #{resnet_block3d_forward.5} parent=0 // loop_pre_header
    _
  $region3: #{resnet_block3d_forward.5} parent=0 // loop_header
    %s12 = sphi 0, %s16
    %p13 = scmp.ge.s32.totalorder %s12, 4
    %s19 = sphi 0, %s31
    %s20 = sphi 0, %s27
    %s21 = sphi 0, %s19
    %s22 = sphi 0, %s20
    %s23 = sphi 0, %s21
    %s24 = sphi 0, %s22
    %s36 = sphi 0, %s38
    %s39 = sphi 0, %s36
    %s40 = sphi 0, %s39
    %s56 = sphi 0, %s40
    %s60 = sphi 0, %s60
    %s62 = sphi 0, %s60
    %s63 = sphi 0, %s62
    %s77 = sphi 0, %s63
    %s81 = sphi 0, %s81
    %s83 = sphi 0, %s81
    %s84 = sphi 0, %s83
    %s98 = sphi 0, %s84
    %s106 = sphi 0, %s108
    %s109 = sphi 0, %s106
    %s110 = sphi 0, %s109
    %s126 = sphi 0, %s110
    %s134 = sphi 0, %s136
    %s137 = sphi 0, %s134
    %s138 = sphi 0, %s137
    %s154 = sphi 0, %s138
    %s162 = sphi 0, %s164
    %s165 = sphi 0, %s162
    %s166 = sphi 0, %s165
    %s182 = sphi 0, %s166
  $region4: #{resnet_block3d_forward.5} parent=0 // loop_header_branch
    %15 = sbr.rel (%p13) target = $region8
  $region5: #{resnet_block3d_forward.5} parent=0 // loop_body
    %s17 = ssub.s32 %s12, 1
    %s18 = ssub.s32 %s12, 2
    %s25 = sadd.s32 1, %s20
    %p26 = scmp.ge.s32.totalorder %s25, 1
    %s27 = scalar_select %p26, 0, %s25
    %s28 = sadd.s32 1, %s19
    %s29 = scalar_select %p26, %s28, %s19
    %p30 = scmp.ge.s32.totalorder %s29, 2
    %s31 = scalar_select %p30, 0, %s29
    %s32 = ssub.s32 %s19, %s31
    %s33 = ssub.s32 %s20, %s27
    %s34 = sor.u32 %s32, %s33
    %p35 = scmp.eq.s32.totalorder %s34, 0
    %s37 = sadd.s32 %s36, 1
    %s38 = scalar_select %p35, %s36, %s37
    %p41 = pneg %p35
    %p42 = scmp.eq.s32.totalorder %s12, 1
    %p43 = por %p41, %p42
    %p44 = scmp.ne.s32.totalorder %s36, %s39
    %p45 = scmp.eq.s32.totalorder %s12, 0
    %p46 = por %p44, %p45
    %p47 = scmp.ne.s32.totalorder %s36, %s39
    %p48 = scmp.eq.s32.totalorder %s17, 1
    %p49 = por %p47, %p48
    %p50 = scmp.ne.s32.totalorder %s39, %s40
    %p51 = scmp.eq.s32.totalorder %s17, 0
    %p52 = por %p50, %p51
    %p53 = scmp.ne.s32.totalorder %s39, %s40
    %p54 = scmp.eq.s32.totalorder %s18, 1
    %p55 = por %p53, %p54
    %p57 = scmp.ne.s32.totalorder %s40, %s56
    %p58 = scmp.eq.s32.totalorder %s18, 0
    %p59 = por %p57, %p58
    %s61 = sadd.s32 %s60, 1
    %p64 = scmp.eq.s32.totalorder %s12, 1
    %p65 = scmp.ne.s32.totalorder %s60, %s62
    %p66 = scmp.eq.s32.totalorder %s12, 0
    %p67 = por %p65, %p66
    %p68 = scmp.ne.s32.totalorder %s60, %s62
    %p69 = scmp.eq.s32.totalorder %s17, 1
    %p70 = por %p68, %p69
    %p71 = scmp.ne.s32.totalorder %s62, %s63
    %p72 = scmp.eq.s32.totalorder %s17, 0
    %p73 = por %p71, %p72
    %p74 = scmp.ne.s32.totalorder %s62, %s63
    %p75 = scmp.eq.s32.totalorder %s18, 1
    %p76 = por %p74, %p75
    %p78 = scmp.ne.s32.totalorder %s63, %s77
    %p79 = scmp.eq.s32.totalorder %s18, 0
    %p80 = por %p78, %p79
    %s82 = sadd.s32 %s81, 1
    %p85 = scmp.eq.s32.totalorder %s12, 1
    %p86 = scmp.ne.s32.totalorder %s81, %s83
    %p87 = scmp.eq.s32.totalorder %s12, 0
    %p88 = por %p86, %p87
    %p89 = scmp.ne.s32.totalorder %s81, %s83
    %p90 = scmp.eq.s32.totalorder %s17, 1
    %p91 = por %p89, %p90
    %p92 = scmp.ne.s32.totalorder %s83, %s84
    %p93 = scmp.eq.s32.totalorder %s17, 0
    %p94 = por %p92, %p93
    %p95 = scmp.ne.s32.totalorder %s83, %s84
    %p96 = scmp.eq.s32.totalorder %s18, 1
    %p97 = por %p95, %p96
    %p99 = scmp.ne.s32.totalorder %s84, %s98
    %p100 = scmp.eq.s32.totalorder %s18, 0
    %p101 = por %p99, %p100
    %s102 = ssub.s32 %s19, %s31
    %s103 = ssub.s32 %s20, %s27
    %s104 = sor.u32 %s102, %s103
    %p105 = scmp.eq.s32.totalorder %s104, 0
    %s107 = sadd.s32 %s106, 1
    %s108 = scalar_select %p105, %s106, %s107
    %p111 = pneg %p105
    %p112 = scmp.eq.s32.totalorder %s12, 1
    %p113 = por %p111, %p112
    %p114 = scmp.ne.s32.totalorder %s106, %s109
    %p115 = scmp.eq.s32.totalorder %s12, 0
    %p116 = por %p114, %p115
    %p117 = scmp.ne.s32.totalorder %s106, %s109
    %p118 = scmp.eq.s32.totalorder %s17, 1
    %p119 = por %p117, %p118
    %p120 = scmp.ne.s32.totalorder %s109, %s110
    %p121 = scmp.eq.s32.totalorder %s17, 0
    %p122 = por %p120, %p121
    %p123 = scmp.ne.s32.totalorder %s109, %s110
    %p124 = scmp.eq.s32.totalorder %s18, 1
    %p125 = por %p123, %p124
    %p127 = scmp.ne.s32.totalorder %s110, %s126
    %p128 = scmp.eq.s32.totalorder %s18, 0
    %p129 = por %p127, %p128
    %s130 = ssub.s32 %s19, %s31
    %s131 = ssub.s32 %s20, %s27
    %s132 = sor.u32 %s130, %s131
    %p133 = scmp.eq.s32.totalorder %s132, 0
    %s135 = sadd.s32 %s134, 1
    %s136 = scalar_select %p133, %s134, %s135
    %p139 = pneg %p133
    %p140 = scmp.eq.s32.totalorder %s12, 1
    %p141 = por %p139, %p140
    %p142 = scmp.ne.s32.totalorder %s134, %s137
    %p143 = scmp.eq.s32.totalorder %s12, 0
    %p144 = por %p142, %p143
    %p145 = scmp.ne.s32.totalorder %s134, %s137
    %p146 = scmp.eq.s32.totalorder %s17, 1
    %p147 = por %p145, %p146
    %p148 = scmp.ne.s32.totalorder %s137, %s138
    %p149 = scmp.eq.s32.totalorder %s17, 0
    %p150 = por %p148, %p149
    %p151 = scmp.ne.s32.totalorder %s137, %s138
    %p152 = scmp.eq.s32.totalorder %s18, 1
    %p153 = por %p151, %p152
    %p155 = scmp.ne.s32.totalorder %s138, %s154
    %p156 = scmp.eq.s32.totalorder %s18, 0
    %p157 = por %p155, %p156
    %s158 = ssub.s32 %s19, %s31
    %s159 = ssub.s32 %s20, %s27
    %s160 = sor.u32 %s158, %s159
    %p161 = scmp.eq.s32.totalorder %s160, 0
    %s163 = sadd.s32 %s162, 1
    %s164 = scalar_select %p161, %s162, %s163
    %p167 = pneg %p161
    %p168 = scmp.eq.s32.totalorder %s12, 1
    %p169 = por %p167, %p168
    %p170 = scmp.ne.s32.totalorder %s162, %s165
    %p171 = scmp.eq.s32.totalorder %s12, 0
    %p172 = por %p170, %p171
    %p173 = scmp.ne.s32.totalorder %s162, %s165
    %p174 = scmp.eq.s32.totalorder %s17, 1
    %p175 = por %p173, %p174
    %p176 = scmp.ne.s32.totalorder %s165, %s166
    %p177 = scmp.eq.s32.totalorder %s17, 0
    %p178 = por %p176, %p177
    %p179 = scmp.ne.s32.totalorder %s165, %s166
    %p180 = scmp.eq.s32.totalorder %s18, 1
    %p181 = por %p179, %p180
    %p183 = scmp.ne.s32.totalorder %s166, %s182
    %p184 = scmp.eq.s32.totalorder %s18, 0
    %p185 = por %p183, %p184
    %p186 = scmp.le.s32.totalorder 1, %s12
    %p187 = scmp.lt.s32.totalorder %s12, 3
    %p188 = pnand %p186, %p187
    %p189 = pneg %p188
    // Predicated region
    $region9: #{resnet_block3d_forward.5} parent=5 // pred_check
      _
    $region10: #{resnet_block3d_forward.5} parent=5 // pred_check_branch
      %191 = sbr.rel (%p188) target = $region12
    $region11: #{resnet_block3d_forward.5} parent=5 // pred_region
      %s192 = ssub.s32 %s12, 1
      // Predicated region
      $region13: #{resnet_block3d_forward.5} parent=11 // pred_check
        %p193 = pneg %p73
      $region14: #{resnet_block3d_forward.5} parent=11 // pred_check_branch
        %195 = sbr.rel (%p193) target = $region16
      $region15: #{resnet_block3d_forward.5} parent=11 // pred_region
        _
      $region16: #{resnet_block3d_forward.5} parent=11 // pred_fallthru
        _
      // Predicated region
      $region17: #{resnet_block3d_forward.5} parent=11 // pred_check
        %p196 = pneg %p94
      $region18: #{resnet_block3d_forward.5} parent=11 // pred_check_branch
        %198 = sbr.rel (%p196) target = $region20
      $region19: #{resnet_block3d_forward.5} parent=11 // pred_region
        _
      $region20: #{resnet_block3d_forward.5} parent=11 // pred_fallthru
        _
    $region12: #{resnet_block3d_forward.5} parent=5 // pred_fallthru
      _
    %p199 = scmp.lt.s32.totalorder %s12, 2
    // Predicated region
    $region21: #{resnet_block3d_forward.5} parent=5 // pred_check
      %p200 = pneg %p199
    $region22: #{resnet_block3d_forward.5} parent=5 // pred_check_branch
      %202 = sbr.rel (%p200) target = $region24
    $region23: #{resnet_block3d_forward.5} parent=5 // pred_region
      // Predicated region
      $region25: #{resnet_block3d_forward.5} parent=23 // pred_check
        %p203 = pneg %p46
      $region26: #{resnet_block3d_forward.5} parent=23 // pred_check_branch
        %205 = sbr.rel (%p203) target = $region28
      $region27: #{resnet_block3d_forward.5} parent=23 // pred_region
        %s206 = smul.u32 4, %s20
        %p207 = scmp.lt.s32.totalorder %s19, 1
        %s208 = scalar_select %p207, %s19, 1
        %p209 = scmp.lt.s32.totalorder %s206, 3
        %s210 = scalar_select %p209, %s206, 3
        %s211 = smul.addr %s208, 56
        %s212 = sadd.s32 %s210, %s211
        %s213 = smul.addr %s212, 8
        %s214 = scalar_lea.vmem %s0, %s213
        %s215 = smul.u32 4, %s20
      $region28: #{resnet_block3d_forward.5} parent=23 // pred_fallthru
        _
    $region24: #{resnet_block3d_forward.5} parent=5 // pred_fallthru
      _
    %p216 = scmp.le.s32.totalorder 1, %s12
    %p217 = scmp.lt.s32.totalorder %s12, 3
    %p218 = pnand %p216, %p217
    %p219 = pneg %p218
    // Predicated region
    $region29: #{resnet_block3d_forward.5} parent=5 // pred_check
      _
    $region30: #{resnet_block3d_forward.5} parent=5 // pred_check_branch
      %221 = sbr.rel (%p218) target = $region32
    $region31: #{resnet_block3d_forward.5} parent=5 // pred_region
      %s222 = ssub.s32 %s12, 1
      %s223 = smul.u32 4, %s22
      %p224 = scmp.lt.s32.totalorder %s21, 1
      %s225 = scalar_select %p224, %s21, 1
      %p226 = scmp.lt.s32.totalorder %s223, 3
      %s227 = scalar_select %p226, %s223, 3
      %s228 = smul.addr %s225, 56
      %s229 = sadd.s32 %s227, %s228
      %s230 = smul.addr %s229, 8
      %s231 = scalar_lea.vmem %s0, %s230
      %p232 = pneg %p52
      %p233 = pneg %p49
      %p234 = pneg %p73
      %p235 = pneg %p70
      %p236 = pneg %p94
      %p237 = pneg %p91
      %p238 = pneg %p122
      %p239 = pneg %p119
      %s240 = smul.u32 4, %s22
      %p241 = scmp.lt.s32.totalorder %s21, 1
      %s242 = scalar_select %p241, %s21, 1
      %p243 = scmp.lt.s32.totalorder %s240, 3
      %s244 = scalar_select %p243, %s240, 3
      %s245 = smul.addr %s242, 4
      %s246 = sadd.s32 %s244, %s245
      %s247 = smul.addr %s246, 8
      %s248 = scalar_lea.vmem %s3, %s247
      %p249 = pneg %p150
      %p250 = pneg %p147
      %p251 = scmp.lt.s32.totalorder %s21, 1
      %s252 = scalar_select %p251, %s21, 1
      %p253 = scmp.lt.s32.totalorder %s22, 0
      %s254 = scalar_select %p253, %s22, 0
      %s255 = sadd.s32 %s254, %s252
      %s256 = smul.addr %s255, 8
      %s257 = scalar_lea.vmem %s4, %s256
      %p258 = pneg %p178
      %p259 = pneg %p175
      %p260 = scmp.lt.s32.totalorder %s21, 1
      %s261 = scalar_select %p260, %s21, 1
      %p262 = scmp.lt.s32.totalorder %s22, 0
      %s263 = scalar_select %p262, %s22, 0
      %s264 = sadd.s32 %s263, %s261
      %s265 = smul.addr %s264, 8
      %s266 = scalar_lea.vmem %s5, %s265
      %s267 = smul.u32 4, %s22
      %p268 = scmp.lt.s32.totalorder %s21, 1
      %s269 = scalar_select %p268, %s21, 1
      %p270 = scmp.lt.s32.totalorder %s267, 3
      %s271 = scalar_select %p270, %s267, 3
      %s272 = smul.addr %s269, 56
      %s273 = sadd.s32 %s271, %s272
      %s274 = smul.addr %s273, 8
      %s275 = scalar_lea.vmem %s0, %s274
      %s276 = smul.u32 4, %s22
      %s277 = smul.u32 4, %s22
      %p278 = scmp.lt.s32.totalorder %s21, 1
      %s279 = scalar_select %p278, %s21, 1
      %p280 = scmp.lt.s32.totalorder %s277, 3
      %s281 = scalar_select %p280, %s277, 3
      %s282 = smul.addr %s279, 4
      %s283 = sadd.s32 %s281, %s282
      %s284 = smul.addr %s283, 8
      %s285 = scalar_lea.vmem %s3, %s284
      %s286 = smul.u32 4, %s22
      %p287 = scmp.lt.s32.totalorder %s21, 1
      %s288 = scalar_select %p287, %s21, 1
      %p289 = scmp.lt.s32.totalorder %s22, 0
      %s290 = scalar_select %p289, %s22, 0
      %s291 = sadd.s32 %s290, %s288
      %s292 = smul.addr %s291, 8
      %s293 = scalar_lea.vmem %s4, %s292
      %p294 = scmp.lt.s32.totalorder %s21, 1
      %s295 = scalar_select %p294, %s21, 1
      %p296 = scmp.lt.s32.totalorder %s22, 0
      %s297 = scalar_select %p296, %s22, 0
      %s298 = sadd.s32 %s297, %s295
      %s299 = smul.addr %s298, 8
      %s300 = scalar_lea.vmem %s5, %s299
      %v301 = vld [vmem:[%s1] sm:$0xff]
      %v302 = vld [vmem:[%s275] sm:$0xff]
      %v303 = vld [vmem:[%s275 + $0x8] sm:$0xff]
      %v304 = vld [vmem:[%s275 + $0x10] sm:$0xff]
      %v305 = vld [vmem:[%s275 + $0x18] sm:$0xff]
      %v306 = vld [vmem:[%s275 + $0x20] sm:$0xff]
      %v307 = vld [vmem:[%s275 + $0x28] sm:$0xff]
      %v308 = vld [vmem:[%s275 + $0x30] sm:$0xff]
      %v309 = vld [vmem:[%s275 + $0x38] sm:$0xff]
      %v310 = vld [vmem:[%s275 + $0x40] sm:$0xff]
      %v311 = vld [vmem:[%s275 + $0x48] sm:$0xff]
      %v312 = vld [vmem:[%s275 + $0x50] sm:$0xff]
      %v313 = vld [vmem:[%s275 + $0x58] sm:$0xff]
      %v314 = vld [vmem:[%s275 + $0x60] sm:$0xff]
      %v315 = vld [vmem:[%s275 + $0x68] sm:$0xff]
      %v316 = vld [vmem:[%s275 + $0x70] sm:$0xff]
      %v317 = vld [vmem:[%s275 + $0x78] sm:$0xff]
      %v318 = vld [vmem:[%s275 + $0x80] sm:$0xff]
      %v319 = vld [vmem:[%s275 + $0x88] sm:$0xff]
      %v320 = vld [vmem:[%s275 + $0x90] sm:$0xff]
      %v321 = vld [vmem:[%s275 + $0x98] sm:$0xff]
      %v322 = vld [vmem:[%s275 + $0xa0] sm:$0xff]
      %v323 = vld [vmem:[%s275 + $0xa8] sm:$0xff]
      %v324 = vld [vmem:[%s275 + $0xb0] sm:$0xff]
      %v325 = vld [vmem:[%s275 + $0xb8] sm:$0xff]
      %v326 = vld [vmem:[%s275 + $0xc0] sm:$0xff]
      %v327 = vld [vmem:[%s275 + $0xc8] sm:$0xff]
      %v328 = vld [vmem:[%s275 + $0xd0] sm:$0xff]
      %v329 = vld [vmem:[%s275 + $0xd8] sm:$0xff]
      %v330 = vld [vmem:[%s275 + $0xe0] sm:$0xff]
      %v331 = vld [vmem:[%s275 + $0xe8] sm:$0xff]
      %v332 = vld [vmem:[%s275 + $0xf0] sm:$0xff]
      %v333 = vld [vmem:[%s275 + $0xf8] sm:$0xff]
      %v334 = vld [vmem:[%s275 + $0x100] sm:$0xff]
      %v335 = vld [vmem:[%s275 + $0x108] sm:$0xff]
      %v336 = vld [vmem:[%s275 + $0x110] sm:$0xff]
      %v337 = vld [vmem:[%s275 + $0x118] sm:$0xff]
      %v338 = vld [vmem:[%s275 + $0x120] sm:$0xff]
      %v339 = vld [vmem:[%s275 + $0x128] sm:$0xff]
      %v340 = vld [vmem:[%s275 + $0x130] sm:$0xff]
      %v341 = vld [vmem:[%s275 + $0x138] sm:$0xff]
      %v342 = vld [vmem:[%s275 + $0x140] sm:$0xff]
      %v343 = vld [vmem:[%s275 + $0x148] sm:$0xff]
      %v344 = vld [vmem:[%s275 + $0x150] sm:$0xff]
      %v345 = vld [vmem:[%s275 + $0x158] sm:$0xff]
      %v346 = vld [vmem:[%s275 + $0x160] sm:$0xff]
      %v347 = vld [vmem:[%s275 + $0x168] sm:$0xff]
      %v348 = vld [vmem:[%s275 + $0x170] sm:$0xff]
      %v349 = vld [vmem:[%s275 + $0x178] sm:$0xff]
      %v350 = vld [vmem:[%s275 + $0x180] sm:$0xff]
      %v351 = vld [vmem:[%s275 + $0x188] sm:$0xff]
      %v352 = vld [vmem:[%s275 + $0x190] sm:$0xff]
      %v353 = vld [vmem:[%s275 + $0x198] sm:$0xff]
      %v354 = vld [vmem:[%s275 + $0x1a0] sm:$0xf]
      %v355 = vld [vmem:[%s275 + $0x1a8] sm:$0xf]
      %v356 = vld [vmem:[%s275 + $0x1b0] sm:$0xf]
      %v357 = vld [vmem:[%s275 + $0x1b8] sm:$0xf]
      %v358 = vld [vmem:[%s2] sm:$0xff]
      %360 = vset.pattern.permute.xlu0 0
      %361 = vperm.xlu0 %360, %v358
      %v362 = vpop.permute.xlu0 %361
      %vm364 = vcmask 883712
      %v366 = vsel %vm364, %v301, 0
      %vm368 = vcmask 1043456
      %v370 = vsel %vm368, %v354, 0
      %v373 = vsel %vm368, %v355, 0
      %v376 = vsel %vm368, %v356, 0
      %v379 = vsel %vm368, %v357, 0
      %381 = vmatprep.subr.mxu0 0.0
      %382 = vmatpush1.msra.mxu0 0.0
      %383 = vmatprep.subr.mxu0 0.0
      %384 = vmatpush1.msra.mxu0 0.0
      %385 = vmatprep.subr.mxu0 %v373
      %386 = vmatpush1.msra.mxu0 %v370
      %387 = vmatprep.subr.mxu0 %v351
      %388 = vmatpush1.msra.mxu0 %v350
      %389 = vmatprep.subr.mxu0 %v347
      %390 = vmatpush1.msra.mxu0 %v346
      %391 = vmatprep.subr.mxu0 %v343
      %392 = vmatpush1.msra.mxu0 %v342
      %393 = vmatprep.subr.mxu0 %v339
      %394 = vmatpush1.msra.mxu0 %v338
      %395 = vmatprep.subr.mxu0 %v335
      %396 = vmatpush1.msra.mxu0 %v334
      %397 = vmatprep.subr.mxu0 %v331
      %398 = vmatpush1.msra.mxu0 %v330
      %399 = vmatprep.subr.mxu0 %v327
      %400 = vmatpush1.msra.mxu0 %v326
      %401 = vmatprep.subr.mxu0 %v323
      %402 = vmatpush1.msra.mxu0 %v322
      %403 = vmatprep.subr.mxu0 %v319
      %404 = vmatpush1.msra.mxu0 %v318
      %405 = vmatprep.subr.mxu0 %v315
      %406 = vmatpush1.msra.mxu0 %v314
      %407 = vmatprep.subr.mxu0 %v311
      %408 = vmatpush1.msra.mxu0 %v310
      %409 = vmatprep.subr.mxu0 %v307
      %410 = vmatpush1.msra.mxu0 %v306
      %411 = vmatprep.subr.mxu0 %v303
      %412 = vmatpush1.msra.mxu0 %v302
      %413 = vmatprep.subr.mxu0 0.0
      %414 = vmatpush2.msra.mxu0 0.0
      %415 = vmatprep.subr.mxu0 0.0
      %416 = vmatpush2.msra.mxu0 0.0
      %417 = vmatprep.subr.mxu0 0.0
      %418 = vmatpush2.msra.mxu0 0.0
      %419 = vmatprep.subr.mxu0 0.0
      %420 = vmatpush2.msra.mxu0 0.0
      %421 = vmatprep.subr.mxu0 0.0
      %422 = vmatpush2.msra.mxu0 0.0
      %423 = vmatprep.subr.mxu0 0.0
      %424 = vmatpush2.msra.mxu0 0.0
      %425 = vmatprep.subr.mxu0 0.0
      %426 = vmatpush2.msra.mxu0 0.0
      %427 = vmatprep.subr.mxu0 0.0
      %428 = vmatpush2.msra.mxu0 0.0
      %429 = vmatprep.subr.mxu0 0.0
      %430 = vmatpush2.msra.mxu0 0.0
      %431 = vmatprep.subr.mxu0 0.0
      %432 = vmatpush2.msra.mxu0 0.0
      %433 = vmatprep.subr.mxu0 0.0
      %434 = vmatpush2.msra.mxu0 0.0
      %435 = vmatprep.subr.mxu0 0.0
      %436 = vmatpush2.msra.mxu0 0.0
      %437 = vmatprep.subr.mxu0 0.0
      %438 = vmatpush2.msra.mxu0 0.0
      %439 = vmatprep.subr.mxu0 0.0
      %440 = vmatpush2.msra.mxu0 0.0
      %441 = vmatprep.subr.mxu0 0.0
      %442 = vmatpush2.msra.mxu0 0.0
      %443 = vmatprep.subr.mxu0 0.0
      %444 = vmatpush2.msra.mxu0 0.0
      %445 = vmatprep.mubr.f32.mxu0 0.0
      %446 = vmatmul.mubr.f32.gmra.mxu0 %v366
      %v447 = vpop.f32.mrf.mxu0
      %v448 = vadd.f32 %v362, %v447
      %v449 = vpop.f32.mrf.mxu0
      %v450 = vadd.f32 %v362, %v449
      %451 = vdwg.mxu0
      %452 = vmatprep.subr.mxu0 0.0
      %453 = vmatpush1.msra.mxu0 0.0
      %454 = vmatprep.subr.mxu0 0.0
      %455 = vmatpush1.msra.mxu0 0.0
      %456 = vmatprep.subr.mxu0 %v379
      %457 = vmatpush1.msra.mxu0 %v376
      %458 = vmatprep.subr.mxu0 %v353
      %459 = vmatpush1.msra.mxu0 %v352
      %460 = vmatprep.subr.mxu0 %v349
      %461 = vmatpush1.msra.mxu0 %v348
      %462 = vmatprep.subr.mxu0 %v345
      %463 = vmatpush1.msra.mxu0 %v344
      %464 = vmatprep.subr.mxu0 %v341
      %465 = vmatpush1.msra.mxu0 %v340
      %466 = vmatprep.subr.mxu0 %v337
      %467 = vmatpush1.msra.mxu0 %v336
      %468 = vmatprep.subr.mxu0 %v333
      %469 = vmatpush1.msra.mxu0 %v332
      %470 = vmatprep.subr.mxu0 %v329
      %471 = vmatpush1.msra.mxu0 %v328
      %472 = vmatprep.subr.mxu0 %v325
      %473 = vmatpush1.msra.mxu0 %v324
      %474 = vmatprep.subr.mxu0 %v321
      %475 = vmatpush1.msra.mxu0 %v320
      %476 = vmatprep.subr.mxu0 %v317
      %477 = vmatpush1.msra.mxu0 %v316
      %478 = vmatprep.subr.mxu0 %v313
      %479 = vmatpush1.msra.mxu0 %v312
      %480 = vmatprep.subr.mxu0 %v309
      %481 = vmatpush1.msra.mxu0 %v308
      %482 = vmatprep.subr.mxu0 %v305
      %483 = vmatpush1.msra.mxu0 %v304
      %484 = vmatprep.subr.mxu0 0.0
      %485 = vmatpush2.msra.mxu0 0.0
      %486 = vmatprep.subr.mxu0 0.0
      %487 = vmatpush2.msra.mxu0 0.0
      %488 = vmatprep.subr.mxu0 0.0
      %489 = vmatpush2.msra.mxu0 0.0
      %490 = vmatprep.subr.mxu0 0.0
      %491 = vmatpush2.msra.mxu0 0.0
      %492 = vmatprep.subr.mxu0 0.0
      %493 = vmatpush2.msra.mxu0 0.0
      %494 = vmatprep.subr.mxu0 0.0
      %495 = vmatpush2.msra.mxu0 0.0
      %496 = vmatprep.subr.mxu0 0.0
      %497 = vmatpush2.msra.mxu0 0.0
      %498 = vmatprep.subr.mxu0 0.0
      %499 = vmatpush2.msra.mxu0 0.0
      %500 = vmatprep.subr.mxu0 0.0
      %501 = vmatpush2.msra.mxu0 0.0
      %502 = vmatprep.subr.mxu0 0.0
      %503 = vmatpush2.msra.mxu0 0.0
      %504 = vmatprep.subr.mxu0 0.0
      %505 = vmatpush2.msra.mxu0 0.0
      %506 = vmatprep.subr.mxu0 0.0
      %507 = vmatpush2.msra.mxu0 0.0
      %508 = vmatprep.subr.mxu0 0.0
      %509 = vmatpush2.msra.mxu0 0.0
      %510 = vmatprep.subr.mxu0 0.0
      %511 = vmatpush2.msra.mxu0 0.0
      %512 = vmatprep.subr.mxu0 0.0
      %513 = vmatpush2.msra.mxu0 0.0
      %514 = vmatprep.subr.mxu0 0.0
      %515 = vmatpush2.msra.mxu0 0.0
      %516 = vmatprep.mubr.f32.mxu0 0.0
      %517 = vmatmul.mubr.f32.gmra.mxu0 %v366
      %v518 = vpop.f32.mrf.mxu0
      %v519 = vadd.f32 %v362, %v518
      %v520 = vpop.f32.mrf.mxu0
      %v521 = vadd.f32 %v362, %v520
      %522 = vdwg.mxu0
      %523 = vst [vmem:[%s285] sm:$0xff] %v448
      %524 = vst [vmem:[%s285 + $0x8] sm:$0xff] %v450
      %525 = vst [vmem:[%s285 + $0x10] sm:$0xff] %v519
      %526 = vst [vmem:[%s285 + $0x18] sm:$0xff] %v521
      %v527 = vadd.f32 %v448, %v450
      %v528 = vadd.f32 %v527, %v519
      %v529 = vadd.f32 %v528, %v521
      %530 = vadd.xlane.f32.xlu0 %v529
      %v531 = vpop.xlane.xlu0 %530
      %vm532 = vcmask 7168
      %533 = vst.msk [vmem:[%s293] sm:$0xff] %vm532, %v531
      %v534 = vmul.f32 %v448, %v448
      %v535 = vmul.f32 %v450, %v450
      %v536 = vmul.f32 %v519, %v519
      %v537 = vmul.f32 %v521, %v521
      %v538 = vadd.f32 %v534, %v535
      %v539 = vadd.f32 %v538, %v536
      %v540 = vadd.f32 %v539, %v537
      %541 = vadd.xlane.f32.xlu0 %v540
      %v542 = vpop.xlane.xlu0 %541
      %543 = vst.msk [vmem:[%s300] sm:$0xff] %vm532, %v542
      %s544 = smul.u32 4, %s22
      %p545 = scmp.lt.s32.totalorder %s21, 1
      %s546 = scalar_select %p545, %s21, 1
      %p547 = scmp.lt.s32.totalorder %s544, 3
      %s548 = scalar_select %p547, %s544, 3
      %s549 = smul.addr %s546, 4
      %s550 = sadd.s32 %s548, %s549
      %s551 = smul.addr %s550, 8
      %s552 = scalar_lea.vmem %s3, %s551
      %p553 = scmp.lt.s32.totalorder %s21, 1
      %s554 = scalar_select %p553, %s21, 1
      %p555 = scmp.lt.s32.totalorder %s22, 0
      %s556 = scalar_select %p555, %s22, 0
      %s557 = sadd.s32 %s556, %s554
      %s558 = smul.addr %s557, 8
      %s559 = scalar_lea.vmem %s4, %s558
      %p560 = scmp.lt.s32.totalorder %s21, 1
      %s561 = scalar_select %p560, %s21, 1
      %p562 = scmp.lt.s32.totalorder %s22, 0
      %s563 = scalar_select %p562, %s22, 0
      %s564 = sadd.s32 %s563, %s561
      %s565 = smul.addr %s564, 8
      %s566 = scalar_lea.vmem %s5, %s565
      // Predicated region
      $region33: #{resnet_block3d_forward.5} parent=31 // pred_check
        %p567 = pneg %p119
      $region34: #{resnet_block3d_forward.5} parent=31 // pred_check_branch
        %569 = sbr.rel (%p567) target = $region36
      $region35: #{resnet_block3d_forward.5} parent=31 // pred_region
        %s570 = smul.u32 4, %s22
      $region36: #{resnet_block3d_forward.5} parent=31 // pred_fallthru
        _
      // Predicated region
      $region37: #{resnet_block3d_forward.5} parent=31 // pred_check
        %p571 = pneg %p147
      $region38: #{resnet_block3d_forward.5} parent=31 // pred_check_branch
        %573 = sbr.rel (%p571) target = $region40
      $region39: #{resnet_block3d_forward.5} parent=31 // pred_region
        _
      $region40: #{resnet_block3d_forward.5} parent=31 // pred_fallthru
        _
      // Predicated region
      $region41: #{resnet_block3d_forward.5} parent=31 // pred_check
        %p574 = pneg %p175
      $region42: #{resnet_block3d_forward.5} parent=31 // pred_check_branch
        %576 = sbr.rel (%p574) target = $region44
      $region43: #{resnet_block3d_forward.5} parent=31 // pred_region
        _
      $region44: #{resnet_block3d_forward.5} parent=31 // pred_fallthru
        _
    $region32: #{resnet_block3d_forward.5} parent=5 // pred_fallthru
      _
    %p577 = scmp.le.s32.totalorder 2, %s12
    // Predicated region
    $region45: #{resnet_block3d_forward.5} parent=5 // pred_check
      %p578 = pneg %p577
    $region46: #{resnet_block3d_forward.5} parent=5 // pred_check_branch
      %580 = sbr.rel (%p578) target = $region48
    $region47: #{resnet_block3d_forward.5} parent=5 // pred_region
      %s581 = ssub.s32 %s12, 2
      // Predicated region
      $region49: #{resnet_block3d_forward.5} parent=47 // pred_check
        %p582 = pneg %p125
      $region50: #{resnet_block3d_forward.5} parent=47 // pred_check_branch
        %584 = sbr.rel (%p582) target = $region52
      $region51: #{resnet_block3d_forward.5} parent=47 // pred_region
        %s585 = smul.u32 4, %s24
        %p586 = scmp.lt.s32.totalorder %s23, 1
        %s587 = scalar_select %p586, %s23, 1
        %p588 = scmp.lt.s32.totalorder %s585, 3
        %s589 = scalar_select %p588, %s585, 3
        %s590 = smul.addr %s587, 4
        %s591 = sadd.s32 %s589, %s590
        %s592 = smul.addr %s591, 8
        %s593 = scalar_lea.vmem %s3, %s592
      $region52: #{resnet_block3d_forward.5} parent=47 // pred_fallthru
        _
      // Predicated region
      $region53: #{resnet_block3d_forward.5} parent=47 // pred_check
        %p594 = pneg %p153
      $region54: #{resnet_block3d_forward.5} parent=47 // pred_check_branch
        %596 = sbr.rel (%p594) target = $region56
      $region55: #{resnet_block3d_forward.5} parent=47 // pred_region
        %p597 = scmp.lt.s32.totalorder %s23, 1
        %s598 = scalar_select %p597, %s23, 1
        %p599 = scmp.lt.s32.totalorder %s24, 0
        %s600 = scalar_select %p599, %s24, 0
        %s601 = sadd.s32 %s600, %s598
        %s602 = smul.addr %s601, 8
        %s603 = scalar_lea.vmem %s4, %s602
      $region56: #{resnet_block3d_forward.5} parent=47 // pred_fallthru
        _
      // Predicated region
      $region57: #{resnet_block3d_forward.5} parent=47 // pred_check
        %p604 = pneg %p181
      $region58: #{resnet_block3d_forward.5} parent=47 // pred_check_branch
        %606 = sbr.rel (%p604) target = $region60
      $region59: #{resnet_block3d_forward.5} parent=47 // pred_region
        %p607 = scmp.lt.s32.totalorder %s23, 1
        %s608 = scalar_select %p607, %s23, 1
        %p609 = scmp.lt.s32.totalorder %s24, 0
        %s610 = scalar_select %p609, %s24, 0
        %s611 = sadd.s32 %s610, %s608
        %s612 = smul.addr %s611, 8
        %s613 = scalar_lea.vmem %s5, %s612
      $region60: #{resnet_block3d_forward.5} parent=47 // pred_fallthru
        _
    $region48: #{resnet_block3d_forward.5} parent=5 // pred_fallthru
      _
  $region6: #{resnet_block3d_forward.5} parent=0 // loop_footer
    %s16 = sadd.s32 1, %s12
  $region7: #{resnet_block3d_forward.5} parent=0 // loop_footer_branch
    %11 = sbr.rel target = $region3
  $region8: #{resnet_block3d_forward.5} parent=0 // loop_exit
    _

// kernel: resnet_block3d_forward.6
$region0: #{resnet_block3d_forward.6}
  #allocation0 [shape = 'u32[]', space=smem, size = 0x4, offset = 0x4, fixed_abs, tag = 'smem constant byte address 0x4 - core index']
  #allocation1 [shape = 'u32[144,128]{1,0:T(1,128)}', space=vmem, size = 0x12000, scoped, tag = 'internal scratch']
  %s0 = inlined_call_operand.vmem [shape: f32[2,8,512], index: 0, kind: input, shape index: {}]
  %s1 = inlined_call_operand.vmem [shape: f32[2,8,1], index: 1, kind: input, shape index: {}]
  %s2 = inlined_call_operand.vmem [shape: f32[2,8,1], index: 2, kind: input, shape index: {}]
  %s3 = inlined_call_operand.vmem [shape: f32[2,8,512], index: 3, kind: output, shape index: {}]
  %s4 = sld [smem:[#allocation0]]
  $region45: #{resnet_block3d_forward.6} parent=0
    _
  %s6 = ssub.s32 1, %s4
  %s7 = scalar_select 0, %s6, %s4
  loop: start=0, step=1, limit=4
  $region2: #{resnet_block3d_forward.6} parent=0 // loop_pre_header
    _
  $region3: #{resnet_block3d_forward.6} parent=0 // loop_header
    %s9 = sphi 0, %s13
    %p10 = scmp.ge.s32.totalorder %s9, 4
    %s16 = sphi 0, %s28
    %s17 = sphi 0, %s24
    %s18 = sphi 0, %s16
    %s19 = sphi 0, %s17
    %s20 = sphi 0, %s18
    %s21 = sphi 0, %s19
    %s33 = sphi 0, %s35
    %s36 = sphi 0, %s33
    %s37 = sphi 0, %s36
    %s53 = sphi 0, %s37
    %s59 = sphi 0, %s61
    %s62 = sphi 0, %s59
    %s63 = sphi 0, %s62
    %s79 = sphi 0, %s63
    %s85 = sphi 0, %s87
    %s88 = sphi 0, %s85
    %s89 = sphi 0, %s88
    %s105 = sphi 0, %s89
    %s113 = sphi 0, %s115
    %s116 = sphi 0, %s113
    %s117 = sphi 0, %s116
    %s133 = sphi 0, %s117
  $region4: #{resnet_block3d_forward.6} parent=0 // loop_header_branch
    %12 = sbr.rel (%p10) target = $region8
  $region5: #{resnet_block3d_forward.6} parent=0 // loop_body
    %s14 = ssub.s32 %s9, 1
    %s15 = ssub.s32 %s9, 2
    %s22 = sadd.s32 1, %s17
    %p23 = scmp.ge.s32.totalorder %s22, 1
    %s24 = scalar_select %p23, 0, %s22
    %s25 = sadd.s32 1, %s16
    %s26 = scalar_select %p23, %s25, %s16
    %p27 = scmp.ge.s32.totalorder %s26, 2
    %s28 = scalar_select %p27, 0, %s26
    %s29 = ssub.s32 %s16, %s28
    %s30 = ssub.s32 %s17, %s24
    %s31 = sor.u32 %s29, %s30
    %p32 = scmp.eq.s32.totalorder %s31, 0
    %s34 = sadd.s32 %s33, 1
    %s35 = scalar_select %p32, %s33, %s34
    %p38 = pneg %p32
    %p39 = scmp.eq.s32.totalorder %s9, 1
    %p40 = por %p38, %p39
    %p41 = scmp.ne.s32.totalorder %s33, %s36
    %p42 = scmp.eq.s32.totalorder %s9, 0
    %p43 = por %p41, %p42
    %p44 = scmp.ne.s32.totalorder %s33, %s36
    %p45 = scmp.eq.s32.totalorder %s14, 1
    %p46 = por %p44, %p45
    %p47 = scmp.ne.s32.totalorder %s36, %s37
    %p48 = scmp.eq.s32.totalorder %s14, 0
    %p49 = por %p47, %p48
    %p50 = scmp.ne.s32.totalorder %s36, %s37
    %p51 = scmp.eq.s32.totalorder %s15, 1
    %p52 = por %p50, %p51
    %p54 = scmp.ne.s32.totalorder %s37, %s53
    %p55 = scmp.eq.s32.totalorder %s15, 0
    %p56 = por %p54, %p55
    %s57 = ssub.s32 %s16, %s28
    %p58 = scmp.eq.s32.totalorder %s57, 0
    %s60 = sadd.s32 %s59, 1
    %s61 = scalar_select %p58, %s59, %s60
    %p64 = pneg %p58
    %p65 = scmp.eq.s32.totalorder %s9, 1
    %p66 = por %p64, %p65
    %p67 = scmp.ne.s32.totalorder %s59, %s62
    %p68 = scmp.eq.s32.totalorder %s9, 0
    %p69 = por %p67, %p68
    %p70 = scmp.ne.s32.totalorder %s59, %s62
    %p71 = scmp.eq.s32.totalorder %s14, 1
    %p72 = por %p70, %p71
    %p73 = scmp.ne.s32.totalorder %s62, %s63
    %p74 = scmp.eq.s32.totalorder %s14, 0
    %p75 = por %p73, %p74
    %p76 = scmp.ne.s32.totalorder %s62, %s63
    %p77 = scmp.eq.s32.totalorder %s15, 1
    %p78 = por %p76, %p77
    %p80 = scmp.ne.s32.totalorder %s63, %s79
    %p81 = scmp.eq.s32.totalorder %s15, 0
    %p82 = por %p80, %p81
    %s83 = ssub.s32 %s16, %s28
    %p84 = scmp.eq.s32.totalorder %s83, 0
    %s86 = sadd.s32 %s85, 1
    %s87 = scalar_select %p84, %s85, %s86
    %p90 = pneg %p84
    %p91 = scmp.eq.s32.totalorder %s9, 1
    %p92 = por %p90, %p91
    %p93 = scmp.ne.s32.totalorder %s85, %s88
    %p94 = scmp.eq.s32.totalorder %s9, 0
    %p95 = por %p93, %p94
    %p96 = scmp.ne.s32.totalorder %s85, %s88
    %p97 = scmp.eq.s32.totalorder %s14, 1
    %p98 = por %p96, %p97
    %p99 = scmp.ne.s32.totalorder %s88, %s89
    %p100 = scmp.eq.s32.totalorder %s14, 0
    %p101 = por %p99, %p100
    %p102 = scmp.ne.s32.totalorder %s88, %s89
    %p103 = scmp.eq.s32.totalorder %s15, 1
    %p104 = por %p102, %p103
    %p106 = scmp.ne.s32.totalorder %s89, %s105
    %p107 = scmp.eq.s32.totalorder %s15, 0
    %p108 = por %p106, %p107
    %s109 = ssub.s32 %s16, %s28
    %s110 = ssub.s32 %s17, %s24
    %s111 = sor.u32 %s109, %s110
    %p112 = scmp.eq.s32.totalorder %s111, 0
    %s114 = sadd.s32 %s113, 1
    %s115 = scalar_select %p112, %s113, %s114
    %p118 = pneg %p112
    %p119 = scmp.eq.s32.totalorder %s9, 1
    %p120 = por %p118, %p119
    %p121 = scmp.ne.s32.totalorder %s113, %s116
    %p122 = scmp.eq.s32.totalorder %s9, 0
    %p123 = por %p121, %p122
    %p124 = scmp.ne.s32.totalorder %s113, %s116
    %p125 = scmp.eq.s32.totalorder %s14, 1
    %p126 = por %p124, %p125
    %p127 = scmp.ne.s32.totalorder %s116, %s117
    %p128 = scmp.eq.s32.totalorder %s14, 0
    %p129 = por %p127, %p128
    %p130 = scmp.ne.s32.totalorder %s116, %s117
    %p131 = scmp.eq.s32.totalorder %s15, 1
    %p132 = por %p130, %p131
    %p134 = scmp.ne.s32.totalorder %s117, %s133
    %p135 = scmp.eq.s32.totalorder %s15, 0
    %p136 = por %p134, %p135
    %p137 = scmp.le.s32.totalorder 1, %s9
    %p138 = scmp.lt.s32.totalorder %s9, 3
    %p139 = pnand %p137, %p138
    %p140 = pneg %p139
    // Predicated region
    $region9: #{resnet_block3d_forward.6} parent=5 // pred_check
      _
    $region10: #{resnet_block3d_forward.6} parent=5 // pred_check_branch
      %142 = sbr.rel (%p139) target = $region12
    $region11: #{resnet_block3d_forward.6} parent=5 // pred_region
      %s143 = ssub.s32 %s9, 1
    $region12: #{resnet_block3d_forward.6} parent=5 // pred_fallthru
      _
    %p144 = scmp.lt.s32.totalorder %s9, 2
    // Predicated region
    $region13: #{resnet_block3d_forward.6} parent=5 // pred_check
      %p145 = pneg %p144
    $region14: #{resnet_block3d_forward.6} parent=5 // pred_check_branch
      %147 = sbr.rel (%p145) target = $region16
    $region15: #{resnet_block3d_forward.6} parent=5 // pred_region
      // Predicated region
      $region17: #{resnet_block3d_forward.6} parent=15 // pred_check
        %p148 = pneg %p43
      $region18: #{resnet_block3d_forward.6} parent=15 // pred_check_branch
        %150 = sbr.rel (%p148) target = $region20
      $region19: #{resnet_block3d_forward.6} parent=15 // pred_region
        %s151 = smul.u32 4, %s17
        %p152 = scmp.lt.s32.totalorder %s16, 1
        %s153 = scalar_select %p152, %s16, 1
        %p154 = scmp.lt.s32.totalorder %s151, 3
        %s155 = scalar_select %p154, %s151, 3
        %s156 = smul.addr %s153, 4
        %s157 = sadd.s32 %s155, %s156
        %s158 = smul.addr %s157, 8
        %s159 = scalar_lea.vmem %s0, %s158
        %s160 = smul.u32 4, %s17
      $region20: #{resnet_block3d_forward.6} parent=15 // pred_fallthru
        _
      // Predicated region
      $region21: #{resnet_block3d_forward.6} parent=15 // pred_check
        %p161 = pneg %p69
      $region22: #{resnet_block3d_forward.6} parent=15 // pred_check_branch
        %163 = sbr.rel (%p161) target = $region24
      $region23: #{resnet_block3d_forward.6} parent=15 // pred_region
        %p164 = scmp.lt.s32.totalorder %s16, 1
        %s165 = scalar_select %p164, %s16, 1
        %s166 = smul.addr %s165, 8
        %s167 = scalar_lea.vmem %s1, %s166
      $region24: #{resnet_block3d_forward.6} parent=15 // pred_fallthru
        _
      // Predicated region
      $region25: #{resnet_block3d_forward.6} parent=15 // pred_check
        %p168 = pneg %p95
      $region26: #{resnet_block3d_forward.6} parent=15 // pred_check_branch
        %170 = sbr.rel (%p168) target = $region28
      $region27: #{resnet_block3d_forward.6} parent=15 // pred_region
        %p171 = scmp.lt.s32.totalorder %s16, 1
        %s172 = scalar_select %p171, %s16, 1
        %s173 = smul.addr %s172, 8
        %s174 = scalar_lea.vmem %s2, %s173
      $region28: #{resnet_block3d_forward.6} parent=15 // pred_fallthru
        _
    $region16: #{resnet_block3d_forward.6} parent=5 // pred_fallthru
      _
    %p175 = scmp.le.s32.totalorder 1, %s9
    %p176 = scmp.lt.s32.totalorder %s9, 3
    %p177 = pnand %p175, %p176
    %p178 = pneg %p177
    // Predicated region
    $region29: #{resnet_block3d_forward.6} parent=5 // pred_check
      _
    $region30: #{resnet_block3d_forward.6} parent=5 // pred_check_branch
      %180 = sbr.rel (%p177) target = $region32
    $region31: #{resnet_block3d_forward.6} parent=5 // pred_region
      %s181 = ssub.s32 %s9, 1
      %s182 = smul.u32 4, %s19
      %p183 = scmp.lt.s32.totalorder %s18, 1
      %s184 = scalar_select %p183, %s18, 1
      %p185 = scmp.lt.s32.totalorder %s182, 3
      %s186 = scalar_select %p185, %s182, 3
      %s187 = smul.addr %s184, 4
      %s188 = sadd.s32 %s186, %s187
      %s189 = smul.addr %s188, 8
      %s190 = scalar_lea.vmem %s0, %s189
      %p191 = pneg %p49
      %p192 = pneg %p46
      %p193 = scmp.lt.s32.totalorder %s18, 1
      %s194 = scalar_select %p193, %s18, 1
      %s195 = smul.addr %s194, 8
      %s196 = scalar_lea.vmem %s1, %s195
      %p197 = pneg %p75
      %p198 = pneg %p72
      %p199 = scmp.lt.s32.totalorder %s18, 1
      %s200 = scalar_select %p199, %s18, 1
      %s201 = smul.addr %s200, 8
      %s202 = scalar_lea.vmem %s2, %s201
      %p203 = pneg %p101
      %p204 = pneg %p98
      %p205 = pneg %p129
      %p206 = pneg %p126
      %s207 = smul.u32 4, %s19
      %p208 = scmp.lt.s32.totalorder %s18, 1
      %s209 = scalar_select %p208, %s18, 1
      %p210 = scmp.lt.s32.totalorder %s207, 3
      %s211 = scalar_select %p210, %s207, 3
      %s212 = smul.addr %s209, 4
      %s213 = sadd.s32 %s211, %s212
      %s214 = smul.addr %s213, 8
      %s215 = scalar_lea.vmem %s3, %s214
      %s216 = smul.u32 4, %s19
      %p217 = scmp.lt.s32.totalorder %s18, 1
      %s218 = scalar_select %p217, %s18, 1
      %p219 = scmp.lt.s32.totalorder %s216, 3
      %s220 = scalar_select %p219, %s216, 3
      %s221 = smul.addr %s218, 4
      %s222 = sadd.s32 %s220, %s221
      %s223 = smul.addr %s222, 8
      %s224 = scalar_lea.vmem %s0, %s223
      %s225 = smul.u32 4, %s19
      %p226 = scmp.lt.s32.totalorder %s18, 1
      %s227 = scalar_select %p226, %s18, 1
      %s228 = smul.addr %s227, 8
      %s229 = scalar_lea.vmem %s1, %s228
      %p230 = scmp.lt.s32.totalorder %s18, 1
      %s231 = scalar_select %p230, %s18, 1
      %s232 = smul.addr %s231, 8
      %s233 = scalar_lea.vmem %s2, %s232
      %s234 = smul.u32 4, %s19
      %p235 = scmp.lt.s32.totalorder %s18, 1
      %s236 = scalar_select %p235, %s18, 1
      %p237 = scmp.lt.s32.totalorder %s234, 3
      %s238 = scalar_select %p237, %s234, 3
      %s239 = smul.addr %s236, 4
      %s240 = sadd.s32 %s238, %s239
      %s241 = smul.addr %s240, 8
      %s242 = scalar_lea.vmem %s3, %s241
      %s243 = smul.u32 4, %s19
      %v244 = vld [vmem:[%s224] sm:$0xff]
      %v245 = vld [vmem:[%s224 + $0x8] sm:$0xff]
      %v246 = vld [vmem:[%s224 + $0x10] sm:$0xff]
      %v247 = vld [vmem:[%s224 + $0x18] sm:$0xff]
      %v248 = vld [vmem:[%s229] sm:$0xff]
      %250 = vset.pattern.permute.xlu0 0
      %251 = vperm.xlu0 %250, %v248
      %v252 = vpop.permute.xlu0 %251
      %v254 = vmul.f32 %v244, %v252
      %v255 = vmul.f32 %v245, %v252
      %v256 = vmul.f32 %v246, %v252
      %v257 = vmul.f32 %v247, %v252
      %v258 = vld [vmem:[%s233] sm:$0xff]
      %260 = vset.pattern.permute.xlu0 0
      %261 = vperm.xlu0 %260, %v258
      %v262 = vpop.permute.xlu0 %261
      %v264 = vadd.f32 %v254, %v262
      %v265 = vadd.f32 %v255, %v262
      %v266 = vadd.f32 %v256, %v262
      %v267 = vadd.f32 %v257, %v262
      %v268 = vmax.f32 %v264, 0.0
      %v269 = vmax.f32 %v265, 0.0
      %v270 = vmax.f32 %v266, 0.0
      %v271 = vmax.f32 %v267, 0.0
      %272 = vst [vmem:[%s242] sm:$0xff] %v268
      %273 = vst [vmem:[%s242 + $0x8] sm:$0xff] %v269
      %274 = vst [vmem:[%s242 + $0x10] sm:$0xff] %v270
      %275 = vst [vmem:[%s242 + $0x18] sm:$0xff] %v271
      %s276 = smul.u32 4, %s19
      %p277 = scmp.lt.s32.totalorder %s18, 1
      %s278 = scalar_select %p277, %s18, 1
      %p279 = scmp.lt.s32.totalorder %s276, 3
      %s280 = scalar_select %p279, %s276, 3
      %s281 = smul.addr %s278, 4
      %s282 = sadd.s32 %s280, %s281
      %s283 = smul.addr %s282, 8
      %s284 = scalar_lea.vmem %s3, %s283
      // Predicated region
      $region33: #{resnet_block3d_forward.6} parent=31 // pred_check
        %p285 = pneg %p126
      $region34: #{resnet_block3d_forward.6} parent=31 // pred_check_branch
        %287 = sbr.rel (%p285) target = $region36
      $region35: #{resnet_block3d_forward.6} parent=31 // pred_region
        %s288 = smul.u32 4, %s19
      $region36: #{resnet_block3d_forward.6} parent=31 // pred_fallthru
        _
    $region32: #{resnet_block3d_forward.6} parent=5 // pred_fallthru
      _
    %p289 = scmp.le.s32.totalorder 2, %s9
    // Predicated region
    $region37: #{resnet_block3d_forward.6} parent=5 // pred_check
      %p290 = pneg %p289
    $region38: #{resnet_block3d_forward.6} parent=5 // pred_check_branch
      %292 = sbr.rel (%p290) target = $region40
    $region39: #{resnet_block3d_forward.6} parent=5 // pred_region
      %s293 = ssub.s32 %s9, 2
      // Predicated region
      $region41: #{resnet_block3d_forward.6} parent=39 // pred_check
        %p294 = pneg %p132
      $region42: #{resnet_block3d_forward.6} parent=39 // pred_check_branch
        %296 = sbr.rel (%p294) target = $region44
      $region43: #{resnet_block3d_forward.6} parent=39 // pred_region
        %s297 = smul.u32 4, %s21
        %p298 = scmp.lt.s32.totalorder %s20, 1
        %s299 = scalar_select %p298, %s20, 1
        %p300 = scmp.lt.s32.totalorder %s297, 3
        %s301 = scalar_select %p300, %s297, 3
        %s302 = smul.addr %s299, 4
        %s303 = sadd.s32 %s301, %s302
        %s304 = smul.addr %s303, 8
        %s305 = scalar_lea.vmem %s3, %s304
      $region44: #{resnet_block3d_forward.6} parent=39 // pred_fallthru
        _
    $region40: #{resnet_block3d_forward.6} parent=5 // pred_fallthru
      _
  $region6: #{resnet_block3d_forward.6} parent=0 // loop_footer
    %s13 = sadd.s32 1, %s9
  $region7: #{resnet_block3d_forward.6} parent=0 // loop_footer_branch
    %8 = sbr.rel target = $region3
  $region8: #{resnet_block3d_forward.6} parent=0 // loop_exit
    _

// kernel: resnet_block3d_forward.9
$region0: #{resnet_block3d_forward.9}
  #allocation0 [shape = 'u32[]', space=smem, size = 0x4, offset = 0x4, fixed_abs, tag = 'smem constant byte address 0x4 - core index']
  #allocation1 [shape = 'u32[144,128]{1,0:T(1,128)}', space=vmem, size = 0x12000, scoped, tag = 'internal scratch']
  %s0 = inlined_call_operand.vmem [shape: f32[2,8,512], index: 0, kind: input, shape index: {}]
  %s1 = inlined_call_operand.vmem [shape: f32[2,8,1], index: 1, kind: input, shape index: {}]
  %s2 = inlined_call_operand.vmem [shape: f32[2,8,1], index: 2, kind: input, shape index: {}]
  %s3 = inlined_call_operand.vmem [shape: f32[2,8,512], index: 3, kind: input, shape index: {}]
  %s4 = inlined_call_operand.vmem [shape: f32[2,8,512], index: 4, kind: output, shape index: {}]
  %s5 = sld [smem:[#allocation0]]
  $region49: #{resnet_block3d_forward.9} parent=0
    _
  %s7 = ssub.s32 1, %s5
  %s8 = scalar_select 0, %s7, %s5
  loop: start=0, step=1, limit=4
  $region2: #{resnet_block3d_forward.9} parent=0 // loop_pre_header
    _
  $region3: #{resnet_block3d_forward.9} parent=0 // loop_header
    %s10 = sphi 0, %s14
    %p11 = scmp.ge.s32.totalorder %s10, 4
    %s17 = sphi 0, %s29
    %s18 = sphi 0, %s25
    %s19 = sphi 0, %s17
    %s20 = sphi 0, %s18
    %s21 = sphi 0, %s19
    %s22 = sphi 0, %s20
    %s34 = sphi 0, %s36
    %s37 = sphi 0, %s34
    %s38 = sphi 0, %s37
    %s54 = sphi 0, %s38
    %s60 = sphi 0, %s62
    %s63 = sphi 0, %s60
    %s64 = sphi 0, %s63
    %s80 = sphi 0, %s64
    %s86 = sphi 0, %s88
    %s89 = sphi 0, %s86
    %s90 = sphi 0, %s89
    %s106 = sphi 0, %s90
    %s114 = sphi 0, %s116
    %s117 = sphi 0, %s114
    %s118 = sphi 0, %s117
    %s134 = sphi 0, %s118
    %s142 = sphi 0, %s144
    %s145 = sphi 0, %s142
    %s146 = sphi 0, %s145
    %s162 = sphi 0, %s146
  $region4: #{resnet_block3d_forward.9} parent=0 // loop_header_branch
    %13 = sbr.rel (%p11) target = $region8
  $region5: #{resnet_block3d_forward.9} parent=0 // loop_body
    %s15 = ssub.s32 %s10, 1
    %s16 = ssub.s32 %s10, 2
    %s23 = sadd.s32 1, %s18
    %p24 = scmp.ge.s32.totalorder %s23, 1
    %s25 = scalar_select %p24, 0, %s23
    %s26 = sadd.s32 1, %s17
    %s27 = scalar_select %p24, %s26, %s17
    %p28 = scmp.ge.s32.totalorder %s27, 2
    %s29 = scalar_select %p28, 0, %s27
    %s30 = ssub.s32 %s17, %s29
    %s31 = ssub.s32 %s18, %s25
    %s32 = sor.u32 %s30, %s31
    %p33 = scmp.eq.s32.totalorder %s32, 0
    %s35 = sadd.s32 %s34, 1
    %s36 = scalar_select %p33, %s34, %s35
    %p39 = pneg %p33
    %p40 = scmp.eq.s32.totalorder %s10, 1
    %p41 = por %p39, %p40
    %p42 = scmp.ne.s32.totalorder %s34, %s37
    %p43 = scmp.eq.s32.totalorder %s10, 0
    %p44 = por %p42, %p43
    %p45 = scmp.ne.s32.totalorder %s34, %s37
    %p46 = scmp.eq.s32.totalorder %s15, 1
    %p47 = por %p45, %p46
    %p48 = scmp.ne.s32.totalorder %s37, %s38
    %p49 = scmp.eq.s32.totalorder %s15, 0
    %p50 = por %p48, %p49
    %p51 = scmp.ne.s32.totalorder %s37, %s38
    %p52 = scmp.eq.s32.totalorder %s16, 1
    %p53 = por %p51, %p52
    %p55 = scmp.ne.s32.totalorder %s38, %s54
    %p56 = scmp.eq.s32.totalorder %s16, 0
    %p57 = por %p55, %p56
    %s58 = ssub.s32 %s17, %s29
    %p59 = scmp.eq.s32.totalorder %s58, 0
    %s61 = sadd.s32 %s60, 1
    %s62 = scalar_select %p59, %s60, %s61
    %p65 = pneg %p59
    %p66 = scmp.eq.s32.totalorder %s10, 1
    %p67 = por %p65, %p66
    %p68 = scmp.ne.s32.totalorder %s60, %s63
    %p69 = scmp.eq.s32.totalorder %s10, 0
    %p70 = por %p68, %p69
    %p71 = scmp.ne.s32.totalorder %s60, %s63
    %p72 = scmp.eq.s32.totalorder %s15, 1
    %p73 = por %p71, %p72
    %p74 = scmp.ne.s32.totalorder %s63, %s64
    %p75 = scmp.eq.s32.totalorder %s15, 0
    %p76 = por %p74, %p75
    %p77 = scmp.ne.s32.totalorder %s63, %s64
    %p78 = scmp.eq.s32.totalorder %s16, 1
    %p79 = por %p77, %p78
    %p81 = scmp.ne.s32.totalorder %s64, %s80
    %p82 = scmp.eq.s32.totalorder %s16, 0
    %p83 = por %p81, %p82
    %s84 = ssub.s32 %s17, %s29
    %p85 = scmp.eq.s32.totalorder %s84, 0
    %s87 = sadd.s32 %s86, 1
    %s88 = scalar_select %p85, %s86, %s87
    %p91 = pneg %p85
    %p92 = scmp.eq.s32.totalorder %s10, 1
    %p93 = por %p91, %p92
    %p94 = scmp.ne.s32.totalorder %s86, %s89
    %p95 = scmp.eq.s32.totalorder %s10, 0
    %p96 = por %p94, %p95
    %p97 = scmp.ne.s32.totalorder %s86, %s89
    %p98 = scmp.eq.s32.totalorder %s15, 1
    %p99 = por %p97, %p98
    %p100 = scmp.ne.s32.totalorder %s89, %s90
    %p101 = scmp.eq.s32.totalorder %s15, 0
    %p102 = por %p100, %p101
    %p103 = scmp.ne.s32.totalorder %s89, %s90
    %p104 = scmp.eq.s32.totalorder %s16, 1
    %p105 = por %p103, %p104
    %p107 = scmp.ne.s32.totalorder %s90, %s106
    %p108 = scmp.eq.s32.totalorder %s16, 0
    %p109 = por %p107, %p108
    %s110 = ssub.s32 %s17, %s29
    %s111 = ssub.s32 %s18, %s25
    %s112 = sor.u32 %s110, %s111
    %p113 = scmp.eq.s32.totalorder %s112, 0
    %s115 = sadd.s32 %s114, 1
    %s116 = scalar_select %p113, %s114, %s115
    %p119 = pneg %p113
    %p120 = scmp.eq.s32.totalorder %s10, 1
    %p121 = por %p119, %p120
    %p122 = scmp.ne.s32.totalorder %s114, %s117
    %p123 = scmp.eq.s32.totalorder %s10, 0
    %p124 = por %p122, %p123
    %p125 = scmp.ne.s32.totalorder %s114, %s117
    %p126 = scmp.eq.s32.totalorder %s15, 1
    %p127 = por %p125, %p126
    %p128 = scmp.ne.s32.totalorder %s117, %s118
    %p129 = scmp.eq.s32.totalorder %s15, 0
    %p130 = por %p128, %p129
    %p131 = scmp.ne.s32.totalorder %s117, %s118
    %p132 = scmp.eq.s32.totalorder %s16, 1
    %p133 = por %p131, %p132
    %p135 = scmp.ne.s32.totalorder %s118, %s134
    %p136 = scmp.eq.s32.totalorder %s16, 0
    %p137 = por %p135, %p136
    %s138 = ssub.s32 %s17, %s29
    %s139 = ssub.s32 %s18, %s25
    %s140 = sor.u32 %s138, %s139
    %p141 = scmp.eq.s32.totalorder %s140, 0
    %s143 = sadd.s32 %s142, 1
    %s144 = scalar_select %p141, %s142, %s143
    %p147 = pneg %p141
    %p148 = scmp.eq.s32.totalorder %s10, 1
    %p149 = por %p147, %p148
    %p150 = scmp.ne.s32.totalorder %s142, %s145
    %p151 = scmp.eq.s32.totalorder %s10, 0
    %p152 = por %p150, %p151
    %p153 = scmp.ne.s32.totalorder %s142, %s145
    %p154 = scmp.eq.s32.totalorder %s15, 1
    %p155 = por %p153, %p154
    %p156 = scmp.ne.s32.totalorder %s145, %s146
    %p157 = scmp.eq.s32.totalorder %s15, 0
    %p158 = por %p156, %p157
    %p159 = scmp.ne.s32.totalorder %s145, %s146
    %p160 = scmp.eq.s32.totalorder %s16, 1
    %p161 = por %p159, %p160
    %p163 = scmp.ne.s32.totalorder %s146, %s162
    %p164 = scmp.eq.s32.totalorder %s16, 0
    %p165 = por %p163, %p164
    %p166 = scmp.le.s32.totalorder 1, %s10
    %p167 = scmp.lt.s32.totalorder %s10, 3
    %p168 = pnand %p166, %p167
    %p169 = pneg %p168
    // Predicated region
    $region9: #{resnet_block3d_forward.9} parent=5 // pred_check
      _
    $region10: #{resnet_block3d_forward.9} parent=5 // pred_check_branch
      %171 = sbr.rel (%p168) target = $region12
    $region11: #{resnet_block3d_forward.9} parent=5 // pred_region
      %s172 = ssub.s32 %s10, 1
    $region12: #{resnet_block3d_forward.9} parent=5 // pred_fallthru
      _
    %p173 = scmp.lt.s32.totalorder %s10, 2
    // Predicated region
    $region13: #{resnet_block3d_forward.9} parent=5 // pred_check
      %p174 = pneg %p173
    $region14: #{resnet_block3d_forward.9} parent=5 // pred_check_branch
      %176 = sbr.rel (%p174) target = $region16
    $region15: #{resnet_block3d_forward.9} parent=5 // pred_region
      // Predicated region
      $region17: #{resnet_block3d_forward.9} parent=15 // pred_check
        %p177 = pneg %p44
      $region18: #{resnet_block3d_forward.9} parent=15 // pred_check_branch
        %179 = sbr.rel (%p177) target = $region20
      $region19: #{resnet_block3d_forward.9} parent=15 // pred_region
        %s180 = smul.u32 4, %s18
        %p181 = scmp.lt.s32.totalorder %s17, 1
        %s182 = scalar_select %p181, %s17, 1
        %p183 = scmp.lt.s32.totalorder %s180, 3
        %s184 = scalar_select %p183, %s180, 3
        %s185 = smul.addr %s182, 4
        %s186 = sadd.s32 %s184, %s185
        %s187 = smul.addr %s186, 8
        %s188 = scalar_lea.vmem %s0, %s187
        %s189 = smul.u32 4, %s18
      $region20: #{resnet_block3d_forward.9} parent=15 // pred_fallthru
        _
      // Predicated region
      $region21: #{resnet_block3d_forward.9} parent=15 // pred_check
        %p190 = pneg %p70
      $region22: #{resnet_block3d_forward.9} parent=15 // pred_check_branch
        %192 = sbr.rel (%p190) target = $region24
      $region23: #{resnet_block3d_forward.9} parent=15 // pred_region
        %p193 = scmp.lt.s32.totalorder %s17, 1
        %s194 = scalar_select %p193, %s17, 1
        %s195 = smul.addr %s194, 8
        %s196 = scalar_lea.vmem %s1, %s195
      $region24: #{resnet_block3d_forward.9} parent=15 // pred_fallthru
        _
      // Predicated region
      $region25: #{resnet_block3d_forward.9} parent=15 // pred_check
        %p197 = pneg %p96
      $region26: #{resnet_block3d_forward.9} parent=15 // pred_check_branch
        %199 = sbr.rel (%p197) target = $region28
      $region27: #{resnet_block3d_forward.9} parent=15 // pred_region
        %p200 = scmp.lt.s32.totalorder %s17, 1
        %s201 = scalar_select %p200, %s17, 1
        %s202 = smul.addr %s201, 8
        %s203 = scalar_lea.vmem %s2, %s202
      $region28: #{resnet_block3d_forward.9} parent=15 // pred_fallthru
        _
      // Predicated region
      $region29: #{resnet_block3d_forward.9} parent=15 // pred_check
        %p204 = pneg %p124
      $region30: #{resnet_block3d_forward.9} parent=15 // pred_check_branch
        %206 = sbr.rel (%p204) target = $region32
      $region31: #{resnet_block3d_forward.9} parent=15 // pred_region
        %s207 = smul.u32 4, %s18
        %p208 = scmp.lt.s32.totalorder %s17, 1
        %s209 = scalar_select %p208, %s17, 1
        %p210 = scmp.lt.s32.totalorder %s207, 3
        %s211 = scalar_select %p210, %s207, 3
        %s212 = smul.addr %s209, 4
        %s213 = sadd.s32 %s211, %s212
        %s214 = smul.addr %s213, 8
        %s215 = scalar_lea.vmem %s3, %s214
        %s216 = smul.u32 4, %s18
      $region32: #{resnet_block3d_forward.9} parent=15 // pred_fallthru
        _
    $region16: #{resnet_block3d_forward.9} parent=5 // pred_fallthru
      _
    %p217 = scmp.le.s32.totalorder 1, %s10
    %p218 = scmp.lt.s32.totalorder %s10, 3
    %p219 = pnand %p217, %p218
    %p220 = pneg %p219
    // Predicated region
    $region33: #{resnet_block3d_forward.9} parent=5 // pred_check
      _
    $region34: #{resnet_block3d_forward.9} parent=5 // pred_check_branch
      %222 = sbr.rel (%p219) target = $region36
    $region35: #{resnet_block3d_forward.9} parent=5 // pred_region
      %s223 = ssub.s32 %s10, 1
      %s224 = smul.u32 4, %s20
      %p225 = scmp.lt.s32.totalorder %s19, 1
      %s226 = scalar_select %p225, %s19, 1
      %p227 = scmp.lt.s32.totalorder %s224, 3
      %s228 = scalar_select %p227, %s224, 3
      %s229 = smul.addr %s226, 4
      %s230 = sadd.s32 %s228, %s229
      %s231 = smul.addr %s230, 8
      %s232 = scalar_lea.vmem %s0, %s231
      %p233 = pneg %p50
      %p234 = pneg %p47
      %p235 = scmp.lt.s32.totalorder %s19, 1
      %s236 = scalar_select %p235, %s19, 1
      %s237 = smul.addr %s236, 8
      %s238 = scalar_lea.vmem %s1, %s237
      %p239 = pneg %p76
      %p240 = pneg %p73
      %p241 = scmp.lt.s32.totalorder %s19, 1
      %s242 = scalar_select %p241, %s19, 1
      %s243 = smul.addr %s242, 8
      %s244 = scalar_lea.vmem %s2, %s243
      %p245 = pneg %p102
      %p246 = pneg %p99
      %s247 = smul.u32 4, %s20
      %p248 = scmp.lt.s32.totalorder %s19, 1
      %s249 = scalar_select %p248, %s19, 1
      %p250 = scmp.lt.s32.totalorder %s247, 3
      %s251 = scalar_select %p250, %s247, 3
      %s252 = smul.addr %s249, 4
      %s253 = sadd.s32 %s251, %s252
      %s254 = smul.addr %s253, 8
      %s255 = scalar_lea.vmem %s3, %s254
      %p256 = pneg %p130
      %p257 = pneg %p127
      %p258 = pneg %p158
      %p259 = pneg %p155
      %s260 = smul.u32 4, %s20
      %p261 = scmp.lt.s32.totalorder %s19, 1
      %s262 = scalar_select %p261, %s19, 1
      %p263 = scmp.lt.s32.totalorder %s260, 3
      %s264 = scalar_select %p263, %s260, 3
      %s265 = smul.addr %s262, 4
      %s266 = sadd.s32 %s264, %s265
      %s267 = smul.addr %s266, 8
      %s268 = scalar_lea.vmem %s4, %s267
      %s269 = smul.u32 4, %s20
      %p270 = scmp.lt.s32.totalorder %s19, 1
      %s271 = scalar_select %p270, %s19, 1
      %p272 = scmp.lt.s32.totalorder %s269, 3
      %s273 = scalar_select %p272, %s269, 3
      %s274 = smul.addr %s271, 4
      %s275 = sadd.s32 %s273, %s274
      %s276 = smul.addr %s275, 8
      %s277 = scalar_lea.vmem %s0, %s276
      %s278 = smul.u32 4, %s20
      %p279 = scmp.lt.s32.totalorder %s19, 1
      %s280 = scalar_select %p279, %s19, 1
      %s281 = smul.addr %s280, 8
      %s282 = scalar_lea.vmem %s1, %s281
      %p283 = scmp.lt.s32.totalorder %s19, 1
      %s284 = scalar_select %p283, %s19, 1
      %s285 = smul.addr %s284, 8
      %s286 = scalar_lea.vmem %s2, %s285
      %s287 = smul.u32 4, %s20
      %p288 = scmp.lt.s32.totalorder %s19, 1
      %s289 = scalar_select %p288, %s19, 1
      %p290 = scmp.lt.s32.totalorder %s287, 3
      %s291 = scalar_select %p290, %s287, 3
      %s292 = smul.addr %s289, 4
      %s293 = sadd.s32 %s291, %s292
      %s294 = smul.addr %s293, 8
      %s295 = scalar_lea.vmem %s3, %s294
      %s296 = smul.u32 4, %s20
      %s297 = smul.u32 4, %s20
      %p298 = scmp.lt.s32.totalorder %s19, 1
      %s299 = scalar_select %p298, %s19, 1
      %p300 = scmp.lt.s32.totalorder %s297, 3
      %s301 = scalar_select %p300, %s297, 3
      %s302 = smul.addr %s299, 4
      %s303 = sadd.s32 %s301, %s302
      %s304 = smul.addr %s303, 8
      %s305 = scalar_lea.vmem %s4, %s304
      %s306 = smul.u32 4, %s20
      %v307 = vld [vmem:[%s277] sm:$0xff]
      %v308 = vld [vmem:[%s277 + $0x8] sm:$0xff]
      %v309 = vld [vmem:[%s277 + $0x10] sm:$0xff]
      %v310 = vld [vmem:[%s277 + $0x18] sm:$0xff]
      %v311 = vld [vmem:[%s282] sm:$0xff]
      %313 = vset.pattern.permute.xlu0 0
      %314 = vperm.xlu0 %313, %v311
      %v315 = vpop.permute.xlu0 %314
      %v317 = vmul.f32 %v307, %v315
      %v318 = vmul.f32 %v308, %v315
      %v319 = vmul.f32 %v309, %v315
      %v320 = vmul.f32 %v310, %v315
      %v321 = vld [vmem:[%s286] sm:$0xff]
      %323 = vset.pattern.permute.xlu0 0
      %324 = vperm.xlu0 %323, %v321
      %v325 = vpop.permute.xlu0 %324
      %v327 = vadd.f32 %v317, %v325
      %v328 = vadd.f32 %v318, %v325
      %v329 = vadd.f32 %v319, %v325
      %v330 = vadd.f32 %v320, %v325
      %v331 = vmax.f32 %v327, 0.0
      %v332 = vmax.f32 %v328, 0.0
      %v333 = vmax.f32 %v329, 0.0
      %v334 = vmax.f32 %v330, 0.0
      %v335 = vld [vmem:[%s295] sm:$0xff]
      %v336 = vld [vmem:[%s295 + $0x8] sm:$0xff]
      %v337 = vld [vmem:[%s295 + $0x10] sm:$0xff]
      %v338 = vld [vmem:[%s295 + $0x18] sm:$0xff]
      %v339 = vadd.f32 %v331, %v335
      %v340 = vadd.f32 %v332, %v336
      %v341 = vadd.f32 %v333, %v337
      %v342 = vadd.f32 %v334, %v338
      %343 = vst [vmem:[%s305] sm:$0xff] %v339
      %344 = vst [vmem:[%s305 + $0x8] sm:$0xff] %v340
      %345 = vst [vmem:[%s305 + $0x10] sm:$0xff] %v341
      %346 = vst [vmem:[%s305 + $0x18] sm:$0xff] %v342
      %s347 = smul.u32 4, %s20
      %p348 = scmp.lt.s32.totalorder %s19, 1
      %s349 = scalar_select %p348, %s19, 1
      %p350 = scmp.lt.s32.totalorder %s347, 3
      %s351 = scalar_select %p350, %s347, 3
      %s352 = smul.addr %s349, 4
      %s353 = sadd.s32 %s351, %s352
      %s354 = smul.addr %s353, 8
      %s355 = scalar_lea.vmem %s4, %s354
      // Predicated region
      $region37: #{resnet_block3d_forward.9} parent=35 // pred_check
        %p356 = pneg %p155
      $region38: #{resnet_block3d_forward.9} parent=35 // pred_check_branch
        %358 = sbr.rel (%p356) target = $region40
      $region39: #{resnet_block3d_forward.9} parent=35 // pred_region
        %s359 = smul.u32 4, %s20
      $region40: #{resnet_block3d_forward.9} parent=35 // pred_fallthru
        _
    $region36: #{resnet_block3d_forward.9} parent=5 // pred_fallthru
      _
    %p360 = scmp.le.s32.totalorder 2, %s10
    // Predicated region
    $region41: #{resnet_block3d_forward.9} parent=5 // pred_check
      %p361 = pneg %p360
    $region42: #{resnet_block3d_forward.9} parent=5 // pred_check_branch
      %363 = sbr.rel (%p361) target = $region44
    $region43: #{resnet_block3d_forward.9} parent=5 // pred_region
      %s364 = ssub.s32 %s10, 2
      // Predicated region
      $region45: #{resnet_block3d_forward.9} parent=43 // pred_check
        %p365 = pneg %p161
      $region46: #{resnet_block3d_forward.9} parent=43 // pred_check_branch
        %367 = sbr.rel (%p365) target = $region48
      $region47: #{resnet_block3d_forward.9} parent=43 // pred_region
        %s368 = smul.u32 4, %s22
        %p369 = scmp.lt.s32.totalorder %s21, 1
        %s370 = scalar_select %p369, %s21, 1
        %p371 = scmp.lt.s32.totalorder %s368, 3
        %s372 = scalar_select %p371, %s368, 3
        %s373 = smul.addr %s370, 4
        %s374 = sadd.s32 %s372, %s373
        %s375 = smul.addr %s374, 8
        %s376 = scalar_lea.vmem %s4, %s375
      $region48: #{resnet_block3d_forward.9} parent=43 // pred_fallthru
        _
    $region44: #{resnet_block3d_forward.9} parent=5 // pred_fallthru
      _
  $region6: #{resnet_block3d_forward.9} parent=0 // loop_footer
    %s14 = sadd.s32 1, %s10
  $region7: #{resnet_block3d_forward.9} parent=0 // loop_footer_branch
    %9 = sbr.rel target = $region3
  $region8: #{resnet_block3d_forward.9} parent=0 // loop_exit
    _

// kernel: resnet_block3d_forward.7
$region0: #{resnet_block3d_forward.7}
  #allocation0 [shape = 'u32[]', space=smem, size = 0x4, offset = 0x4, fixed_abs, tag = 'smem constant byte address 0x4 - core index']
  #allocation1 [shape = 'u32[144,128]{1,0:T(1,128)}', space=vmem, size = 0x12000, scoped, tag = 'internal scratch']
  %s0 = inlined_call_operand.vmem [shape: f32[2,216,512], index: 0, kind: input, shape index: {}]
  %s1 = inlined_call_operand.vmem [shape: f32[8,216], index: 1, kind: input, shape index: {}]
  %s2 = inlined_call_operand.vmem [shape: f32[8,1], index: 2, kind: input, shape index: {}]
  %s3 = inlined_call_operand.vmem [shape: f32[2,8,512], index: 3, kind: output, shape index: {0}]
  %s4 = inlined_call_operand.vmem [shape: f32[2,1,8,1], index: 4, kind: output, shape index: {1}]
  %s5 = inlined_call_operand.vmem [shape: f32[2,1,8,1], index: 5, kind: output, shape index: {2}]
  %6 = xla_tuple %s3, %s4, %s5
  %s7 = sld [smem:[#allocation0]]
  $region61: #{resnet_block3d_forward.7} parent=0
    _
  %s9 = ssub.s32 1, %s7
  %s10 = scalar_select 0, %s9, %s7
  loop: start=0, step=1, limit=4
  $region2: #{resnet_block3d_forward.7} parent=0 // loop_pre_header
    _
  $region3: #{resnet_block3d_forward.7} parent=0 // loop_header
    %s12 = sphi 0, %s16
    %p13 = scmp.ge.s32.totalorder %s12, 4
    %s19 = sphi 0, %s31
    %s20 = sphi 0, %s27
    %s21 = sphi 0, %s19
    %s22 = sphi 0, %s20
    %s23 = sphi 0, %s21
    %s24 = sphi 0, %s22
    %s36 = sphi 0, %s38
    %s39 = sphi 0, %s36
    %s40 = sphi 0, %s39
    %s56 = sphi 0, %s40
    %s60 = sphi 0, %s60
    %s62 = sphi 0, %s60
    %s63 = sphi 0, %s62
    %s77 = sphi 0, %s63
    %s81 = sphi 0, %s81
    %s83 = sphi 0, %s81
    %s84 = sphi 0, %s83
    %s98 = sphi 0, %s84
    %s106 = sphi 0, %s108
    %s109 = sphi 0, %s106
    %s110 = sphi 0, %s109
    %s126 = sphi 0, %s110
    %s134 = sphi 0, %s136
    %s137 = sphi 0, %s134
    %s138 = sphi 0, %s137
    %s154 = sphi 0, %s138
    %s162 = sphi 0, %s164
    %s165 = sphi 0, %s162
    %s166 = sphi 0, %s165
    %s182 = sphi 0, %s166
  $region4: #{resnet_block3d_forward.7} parent=0 // loop_header_branch
    %15 = sbr.rel (%p13) target = $region8
  $region5: #{resnet_block3d_forward.7} parent=0 // loop_body
    %s17 = ssub.s32 %s12, 1
    %s18 = ssub.s32 %s12, 2
    %s25 = sadd.s32 1, %s20
    %p26 = scmp.ge.s32.totalorder %s25, 1
    %s27 = scalar_select %p26, 0, %s25
    %s28 = sadd.s32 1, %s19
    %s29 = scalar_select %p26, %s28, %s19
    %p30 = scmp.ge.s32.totalorder %s29, 2
    %s31 = scalar_select %p30, 0, %s29
    %s32 = ssub.s32 %s19, %s31
    %s33 = ssub.s32 %s20, %s27
    %s34 = sor.u32 %s32, %s33
    %p35 = scmp.eq.s32.totalorder %s34, 0
    %s37 = sadd.s32 %s36, 1
    %s38 = scalar_select %p35, %s36, %s37
    %p41 = pneg %p35
    %p42 = scmp.eq.s32.totalorder %s12, 1
    %p43 = por %p41, %p42
    %p44 = scmp.ne.s32.totalorder %s36, %s39
    %p45 = scmp.eq.s32.totalorder %s12, 0
    %p46 = por %p44, %p45
    %p47 = scmp.ne.s32.totalorder %s36, %s39
    %p48 = scmp.eq.s32.totalorder %s17, 1
    %p49 = por %p47, %p48
    %p50 = scmp.ne.s32.totalorder %s39, %s40
    %p51 = scmp.eq.s32.totalorder %s17, 0
    %p52 = por %p50, %p51
    %p53 = scmp.ne.s32.totalorder %s39, %s40
    %p54 = scmp.eq.s32.totalorder %s18, 1
    %p55 = por %p53, %p54
    %p57 = scmp.ne.s32.totalorder %s40, %s56
    %p58 = scmp.eq.s32.totalorder %s18, 0
    %p59 = por %p57, %p58
    %s61 = sadd.s32 %s60, 1
    %p64 = scmp.eq.s32.totalorder %s12, 1
    %p65 = scmp.ne.s32.totalorder %s60, %s62
    %p66 = scmp.eq.s32.totalorder %s12, 0
    %p67 = por %p65, %p66
    %p68 = scmp.ne.s32.totalorder %s60, %s62
    %p69 = scmp.eq.s32.totalorder %s17, 1
    %p70 = por %p68, %p69
    %p71 = scmp.ne.s32.totalorder %s62, %s63
    %p72 = scmp.eq.s32.totalorder %s17, 0
    %p73 = por %p71, %p72
    %p74 = scmp.ne.s32.totalorder %s62, %s63
    %p75 = scmp.eq.s32.totalorder %s18, 1
    %p76 = por %p74, %p75
    %p78 = scmp.ne.s32.totalorder %s63, %s77
    %p79 = scmp.eq.s32.totalorder %s18, 0
    %p80 = por %p78, %p79
    %s82 = sadd.s32 %s81, 1
    %p85 = scmp.eq.s32.totalorder %s12, 1
    %p86 = scmp.ne.s32.totalorder %s81, %s83
    %p87 = scmp.eq.s32.totalorder %s12, 0
    %p88 = por %p86, %p87
    %p89 = scmp.ne.s32.totalorder %s81, %s83
    %p90 = scmp.eq.s32.totalorder %s17, 1
    %p91 = por %p89, %p90
    %p92 = scmp.ne.s32.totalorder %s83, %s84
    %p93 = scmp.eq.s32.totalorder %s17, 0
    %p94 = por %p92, %p93
    %p95 = scmp.ne.s32.totalorder %s83, %s84
    %p96 = scmp.eq.s32.totalorder %s18, 1
    %p97 = por %p95, %p96
    %p99 = scmp.ne.s32.totalorder %s84, %s98
    %p100 = scmp.eq.s32.totalorder %s18, 0
    %p101 = por %p99, %p100
    %s102 = ssub.s32 %s19, %s31
    %s103 = ssub.s32 %s20, %s27
    %s104 = sor.u32 %s102, %s103
    %p105 = scmp.eq.s32.totalorder %s104, 0
    %s107 = sadd.s32 %s106, 1
    %s108 = scalar_select %p105, %s106, %s107
    %p111 = pneg %p105
    %p112 = scmp.eq.s32.totalorder %s12, 1
    %p113 = por %p111, %p112
    %p114 = scmp.ne.s32.totalorder %s106, %s109
    %p115 = scmp.eq.s32.totalorder %s12, 0
    %p116 = por %p114, %p115
    %p117 = scmp.ne.s32.totalorder %s106, %s109
    %p118 = scmp.eq.s32.totalorder %s17, 1
    %p119 = por %p117, %p118
    %p120 = scmp.ne.s32.totalorder %s109, %s110
    %p121 = scmp.eq.s32.totalorder %s17, 0
    %p122 = por %p120, %p121
    %p123 = scmp.ne.s32.totalorder %s109, %s110
    %p124 = scmp.eq.s32.totalorder %s18, 1
    %p125 = por %p123, %p124
    %p127 = scmp.ne.s32.totalorder %s110, %s126
    %p128 = scmp.eq.s32.totalorder %s18, 0
    %p129 = por %p127, %p128
    %s130 = ssub.s32 %s19, %s31
    %s131 = ssub.s32 %s20, %s27
    %s132 = sor.u32 %s130, %s131
    %p133 = scmp.eq.s32.totalorder %s132, 0
    %s135 = sadd.s32 %s134, 1
    %s136 = scalar_select %p133, %s134, %s135
    %p139 = pneg %p133
    %p140 = scmp.eq.s32.totalorder %s12, 1
    %p141 = por %p139, %p140
    %p142 = scmp.ne.s32.totalorder %s134, %s137
    %p143 = scmp.eq.s32.totalorder %s12, 0
    %p144 = por %p142, %p143
    %p145 = scmp.ne.s32.totalorder %s134, %s137
    %p146 = scmp.eq.s32.totalorder %s17, 1
    %p147 = por %p145, %p146
    %p148 = scmp.ne.s32.totalorder %s137, %s138
    %p149 = scmp.eq.s32.totalorder %s17, 0
    %p150 = por %p148, %p149
    %p151 = scmp.ne.s32.totalorder %s137, %s138
    %p152 = scmp.eq.s32.totalorder %s18, 1
    %p153 = por %p151, %p152
    %p155 = scmp.ne.s32.totalorder %s138, %s154
    %p156 = scmp.eq.s32.totalorder %s18, 0
    %p157 = por %p155, %p156
    %s158 = ssub.s32 %s19, %s31
    %s159 = ssub.s32 %s20, %s27
    %s160 = sor.u32 %s158, %s159
    %p161 = scmp.eq.s32.totalorder %s160, 0
    %s163 = sadd.s32 %s162, 1
    %s164 = scalar_select %p161, %s162, %s163
    %p167 = pneg %p161
    %p168 = scmp.eq.s32.totalorder %s12, 1
    %p169 = por %p167, %p168
    %p170 = scmp.ne.s32.totalorder %s162, %s165
    %p171 = scmp.eq.s32.totalorder %s12, 0
    %p172 = por %p170, %p171
    %p173 = scmp.ne.s32.totalorder %s162, %s165
    %p174 = scmp.eq.s32.totalorder %s17, 1
    %p175 = por %p173, %p174
    %p176 = scmp.ne.s32.totalorder %s165, %s166
    %p177 = scmp.eq.s32.totalorder %s17, 0
    %p178 = por %p176, %p177
    %p179 = scmp.ne.s32.totalorder %s165, %s166
    %p180 = scmp.eq.s32.totalorder %s18, 1
    %p181 = por %p179, %p180
    %p183 = scmp.ne.s32.totalorder %s166, %s182
    %p184 = scmp.eq.s32.totalorder %s18, 0
    %p185 = por %p183, %p184
    %p186 = scmp.le.s32.totalorder 1, %s12
    %p187 = scmp.lt.s32.totalorder %s12, 3
    %p188 = pnand %p186, %p187
    %p189 = pneg %p188
    // Predicated region
    $region9: #{resnet_block3d_forward.7} parent=5 // pred_check
      _
    $region10: #{resnet_block3d_forward.7} parent=5 // pred_check_branch
      %191 = sbr.rel (%p188) target = $region12
    $region11: #{resnet_block3d_forward.7} parent=5 // pred_region
      %s192 = ssub.s32 %s12, 1
      // Predicated region
      $region13: #{resnet_block3d_forward.7} parent=11 // pred_check
        %p193 = pneg %p73
      $region14: #{resnet_block3d_forward.7} parent=11 // pred_check_branch
        %195 = sbr.rel (%p193) target = $region16
      $region15: #{resnet_block3d_forward.7} parent=11 // pred_region
        _
      $region16: #{resnet_block3d_forward.7} parent=11 // pred_fallthru
        _
      // Predicated region
      $region17: #{resnet_block3d_forward.7} parent=11 // pred_check
        %p196 = pneg %p94
      $region18: #{resnet_block3d_forward.7} parent=11 // pred_check_branch
        %198 = sbr.rel (%p196) target = $region20
      $region19: #{resnet_block3d_forward.7} parent=11 // pred_region
        _
      $region20: #{resnet_block3d_forward.7} parent=11 // pred_fallthru
        _
    $region12: #{resnet_block3d_forward.7} parent=5 // pred_fallthru
      _
    %p199 = scmp.lt.s32.totalorder %s12, 2
    // Predicated region
    $region21: #{resnet_block3d_forward.7} parent=5 // pred_check
      %p200 = pneg %p199
    $region22: #{resnet_block3d_forward.7} parent=5 // pred_check_branch
      %202 = sbr.rel (%p200) target = $region24
    $region23: #{resnet_block3d_forward.7} parent=5 // pred_region
      // Predicated region
      $region25: #{resnet_block3d_forward.7} parent=23 // pred_check
        %p203 = pneg %p46
      $region26: #{resnet_block3d_forward.7} parent=23 // pred_check_branch
        %205 = sbr.rel (%p203) target = $region28
      $region27: #{resnet_block3d_forward.7} parent=23 // pred_region
        %s206 = smul.u32 4, %s20
        %p207 = scmp.lt.s32.totalorder %s19, 1
        %s208 = scalar_select %p207, %s19, 1
        %p209 = scmp.lt.s32.totalorder %s206, 3
        %s210 = scalar_select %p209, %s206, 3
        %s211 = smul.addr %s208, 108
        %s212 = sadd.s32 %s210, %s211
        %s213 = smul.addr %s212, 8
        %s214 = scalar_lea.vmem %s0, %s213
        %s215 = smul.u32 4, %s20
      $region28: #{resnet_block3d_forward.7} parent=23 // pred_fallthru
        _
    $region24: #{resnet_block3d_forward.7} parent=5 // pred_fallthru
      _
    %p216 = scmp.le.s32.totalorder 1, %s12
    %p217 = scmp.lt.s32.totalorder %s12, 3
    %p218 = pnand %p216, %p217
    %p219 = pneg %p218
    // Predicated region
    $region29: #{resnet_block3d_forward.7} parent=5 // pred_check
      _
    $region30: #{resnet_block3d_forward.7} parent=5 // pred_check_branch
      %221 = sbr.rel (%p218) target = $region32
    $region31: #{resnet_block3d_forward.7} parent=5 // pred_region
      %s222 = ssub.s32 %s12, 1
      %s223 = smul.u32 4, %s22
      %p224 = scmp.lt.s32.totalorder %s21, 1
      %s225 = scalar_select %p224, %s21, 1
      %p226 = scmp.lt.s32.totalorder %s223, 3
      %s227 = scalar_select %p226, %s223, 3
      %s228 = smul.addr %s225, 108
      %s229 = sadd.s32 %s227, %s228
      %s230 = smul.addr %s229, 8
      %s231 = scalar_lea.vmem %s0, %s230
      %p232 = pneg %p52
      %p233 = pneg %p49
      %p234 = pneg %p73
      %p235 = pneg %p70
      %p236 = pneg %p94
      %p237 = pneg %p91
      %p238 = pneg %p122
      %p239 = pneg %p119
      %s240 = smul.u32 4, %s22
      %p241 = scmp.lt.s32.totalorder %s21, 1
      %s242 = scalar_select %p241, %s21, 1
      %p243 = scmp.lt.s32.totalorder %s240, 3
      %s244 = scalar_select %p243, %s240, 3
      %s245 = smul.addr %s242, 4
      %s246 = sadd.s32 %s244, %s245
      %s247 = smul.addr %s246, 8
      %s248 = scalar_lea.vmem %s3, %s247
      %p249 = pneg %p150
      %p250 = pneg %p147
      %p251 = scmp.lt.s32.totalorder %s21, 1
      %s252 = scalar_select %p251, %s21, 1
      %p253 = scmp.lt.s32.totalorder %s22, 0
      %s254 = scalar_select %p253, %s22, 0
      %s255 = sadd.s32 %s254, %s252
      %s256 = smul.addr %s255, 8
      %s257 = scalar_lea.vmem %s4, %s256
      %p258 = pneg %p178
      %p259 = pneg %p175
      %p260 = scmp.lt.s32.totalorder %s21, 1
      %s261 = scalar_select %p260, %s21, 1
      %p262 = scmp.lt.s32.totalorder %s22, 0
      %s263 = scalar_select %p262, %s22, 0
      %s264 = sadd.s32 %s263, %s261
      %s265 = smul.addr %s264, 8
      %s266 = scalar_lea.vmem %s5, %s265
      %s267 = smul.u32 4, %s22
      %p268 = scmp.lt.s32.totalorder %s21, 1
      %s269 = scalar_select %p268, %s21, 1
      %p270 = scmp.lt.s32.totalorder %s267, 3
      %s271 = scalar_select %p270, %s267, 3
      %s272 = smul.addr %s269, 108
      %s273 = sadd.s32 %s271, %s272
      %s274 = smul.addr %s273, 8
      %s275 = scalar_lea.vmem %s0, %s274
      %s276 = smul.u32 4, %s22
      %s277 = smul.u32 4, %s22
      %p278 = scmp.lt.s32.totalorder %s21, 1
      %s279 = scalar_select %p278, %s21, 1
      %p280 = scmp.lt.s32.totalorder %s277, 3
      %s281 = scalar_select %p280, %s277, 3
      %s282 = smul.addr %s279, 4
      %s283 = sadd.s32 %s281, %s282
      %s284 = smul.addr %s283, 8
      %s285 = scalar_lea.vmem %s3, %s284
      %s286 = smul.u32 4, %s22
      %p287 = scmp.lt.s32.totalorder %s21, 1
      %s288 = scalar_select %p287, %s21, 1
      %p289 = scmp.lt.s32.totalorder %s22, 0
      %s290 = scalar_select %p289, %s22, 0
      %s291 = sadd.s32 %s290, %s288
      %s292 = smul.addr %s291, 8
      %s293 = scalar_lea.vmem %s4, %s292
      %p294 = scmp.lt.s32.totalorder %s21, 1
      %s295 = scalar_select %p294, %s21, 1
      %p296 = scmp.lt.s32.totalorder %s22, 0
      %s297 = scalar_select %p296, %s22, 0
      %s298 = sadd.s32 %s297, %s295
      %s299 = smul.addr %s298, 8
      %s300 = scalar_lea.vmem %s5, %s299
      %v301 = vld [vmem:[%s1] sm:$0xff]
      %v302 = vld [vmem:[%s1 + $0x8] sm:$0xff]
      %v303 = vld [vmem:[%s275] sm:$0xff]
      %v304 = vld [vmem:[%s275 + $0x8] sm:$0xff]
      %v305 = vld [vmem:[%s275 + $0x10] sm:$0xff]
      %v306 = vld [vmem:[%s275 + $0x18] sm:$0xff]
      %v307 = vld [vmem:[%s275 + $0x20] sm:$0xff]
      %v308 = vld [vmem:[%s275 + $0x28] sm:$0xff]
      %v309 = vld [vmem:[%s275 + $0x30] sm:$0xff]
      %v310 = vld [vmem:[%s275 + $0x38] sm:$0xff]
      %v311 = vld [vmem:[%s275 + $0x40] sm:$0xff]
      %v312 = vld [vmem:[%s275 + $0x48] sm:$0xff]
      %v313 = vld [vmem:[%s275 + $0x50] sm:$0xff]
      %v314 = vld [vmem:[%s275 + $0x58] sm:$0xff]
      %v315 = vld [vmem:[%s275 + $0x60] sm:$0xff]
      %v316 = vld [vmem:[%s275 + $0x68] sm:$0xff]
      %v317 = vld [vmem:[%s275 + $0x70] sm:$0xff]
      %v318 = vld [vmem:[%s275 + $0x78] sm:$0xff]
      %v319 = vld [vmem:[%s275 + $0x80] sm:$0xff]
      %v320 = vld [vmem:[%s275 + $0x88] sm:$0xff]
      %v321 = vld [vmem:[%s275 + $0x90] sm:$0xff]
      %v322 = vld [vmem:[%s275 + $0x98] sm:$0xff]
      %v323 = vld [vmem:[%s275 + $0xa0] sm:$0xff]
      %v324 = vld [vmem:[%s275 + $0xa8] sm:$0xff]
      %v325 = vld [vmem:[%s275 + $0xb0] sm:$0xff]
      %v326 = vld [vmem:[%s275 + $0xb8] sm:$0xff]
      %v327 = vld [vmem:[%s275 + $0xc0] sm:$0xff]
      %v328 = vld [vmem:[%s275 + $0xc8] sm:$0xff]
      %v329 = vld [vmem:[%s275 + $0xd0] sm:$0xff]
      %v330 = vld [vmem:[%s275 + $0xd8] sm:$0xff]
      %v331 = vld [vmem:[%s275 + $0xe0] sm:$0xff]
      %v332 = vld [vmem:[%s275 + $0xe8] sm:$0xff]
      %v333 = vld [vmem:[%s275 + $0xf0] sm:$0xff]
      %v334 = vld [vmem:[%s275 + $0xf8] sm:$0xff]
      %v335 = vld [vmem:[%s275 + $0x100] sm:$0xff]
      %v336 = vld [vmem:[%s275 + $0x108] sm:$0xff]
      %v337 = vld [vmem:[%s275 + $0x110] sm:$0xff]
      %v338 = vld [vmem:[%s275 + $0x118] sm:$0xff]
      %v339 = vld [vmem:[%s275 + $0x120] sm:$0xff]
      %v340 = vld [vmem:[%s275 + $0x128] sm:$0xff]
      %v341 = vld [vmem:[%s275 + $0x130] sm:$0xff]
      %v342 = vld [vmem:[%s275 + $0x138] sm:$0xff]
      %v343 = vld [vmem:[%s275 + $0x140] sm:$0xff]
      %v344 = vld [vmem:[%s275 + $0x148] sm:$0xff]
      %v345 = vld [vmem:[%s275 + $0x150] sm:$0xff]
      %v346 = vld [vmem:[%s275 + $0x158] sm:$0xff]
      %v347 = vld [vmem:[%s275 + $0x160] sm:$0xff]
      %v348 = vld [vmem:[%s275 + $0x168] sm:$0xff]
      %v349 = vld [vmem:[%s275 + $0x170] sm:$0xff]
      %v350 = vld [vmem:[%s275 + $0x178] sm:$0xff]
      %v351 = vld [vmem:[%s275 + $0x180] sm:$0xff]
      %v352 = vld [vmem:[%s275 + $0x188] sm:$0xff]
      %v353 = vld [vmem:[%s275 + $0x190] sm:$0xff]
      %v354 = vld [vmem:[%s275 + $0x198] sm:$0xff]
      %v355 = vld [vmem:[%s275 + $0x1a0] sm:$0xff]
      %v356 = vld [vmem:[%s275 + $0x1a8] sm:$0xff]
      %v357 = vld [vmem:[%s275 + $0x1b0] sm:$0xff]
      %v358 = vld [vmem:[%s275 + $0x1b8] sm:$0xff]
      %v359 = vld [vmem:[%s275 + $0x1c0] sm:$0xff]
      %v360 = vld [vmem:[%s275 + $0x1c8] sm:$0xff]
      %v361 = vld [vmem:[%s275 + $0x1d0] sm:$0xff]
      %v362 = vld [vmem:[%s275 + $0x1d8] sm:$0xff]
      %v363 = vld [vmem:[%s275 + $0x1e0] sm:$0xff]
      %v364 = vld [vmem:[%s275 + $0x1e8] sm:$0xff]
      %v365 = vld [vmem:[%s275 + $0x1f0] sm:$0xff]
      %v366 = vld [vmem:[%s275 + $0x1f8] sm:$0xff]
      %v367 = vld [vmem:[%s275 + $0x200] sm:$0xff]
      %v368 = vld [vmem:[%s275 + $0x208] sm:$0xff]
      %v369 = vld [vmem:[%s275 + $0x210] sm:$0xff]
      %v370 = vld [vmem:[%s275 + $0x218] sm:$0xff]
      %v371 = vld [vmem:[%s275 + $0x220] sm:$0xff]
      %v372 = vld [vmem:[%s275 + $0x228] sm:$0xff]
      %v373 = vld [vmem:[%s275 + $0x230] sm:$0xff]
      %v374 = vld [vmem:[%s275 + $0x238] sm:$0xff]
      %v375 = vld [vmem:[%s275 + $0x240] sm:$0xff]
      %v376 = vld [vmem:[%s275 + $0x248] sm:$0xff]
      %v377 = vld [vmem:[%s275 + $0x250] sm:$0xff]
      %v378 = vld [vmem:[%s275 + $0x258] sm:$0xff]
      %v379 = vld [vmem:[%s275 + $0x260] sm:$0xff]
      %v380 = vld [vmem:[%s275 + $0x268] sm:$0xff]
      %v381 = vld [vmem:[%s275 + $0x270] sm:$0xff]
      %v382 = vld [vmem:[%s275 + $0x278] sm:$0xff]
      %v383 = vld [vmem:[%s275 + $0x280] sm:$0xff]
      %v384 = vld [vmem:[%s275 + $0x288] sm:$0xff]
      %v385 = vld [vmem:[%s275 + $0x290] sm:$0xff]
      %v386 = vld [vmem:[%s275 + $0x298] sm:$0xff]
      %v387 = vld [vmem:[%s275 + $0x2a0] sm:$0xff]
      %v388 = vld [vmem:[%s275 + $0x2a8] sm:$0xff]
      %v389 = vld [vmem:[%s275 + $0x2b0] sm:$0xff]
      %v390 = vld [vmem:[%s275 + $0x2b8] sm:$0xff]
      %v391 = vld [vmem:[%s275 + $0x2c0] sm:$0xff]
      %v392 = vld [vmem:[%s275 + $0x2c8] sm:$0xff]
      %v393 = vld [vmem:[%s275 + $0x2d0] sm:$0xff]
      %v394 = vld [vmem:[%s275 + $0x2d8] sm:$0xff]
      %v395 = vld [vmem:[%s275 + $0x2e0] sm:$0xff]
      %v396 = vld [vmem:[%s275 + $0x2e8] sm:$0xff]
      %v397 = vld [vmem:[%s275 + $0x2f0] sm:$0xff]
      %v398 = vld [vmem:[%s275 + $0x2f8] sm:$0xff]
      %v399 = vld [vmem:[%s275 + $0x300] sm:$0xff]
      %v400 = vld [vmem:[%s275 + $0x308] sm:$0xff]
      %v401 = vld [vmem:[%s275 + $0x310] sm:$0xff]
      %v402 = vld [vmem:[%s275 + $0x318] sm:$0xff]
      %v403 = vld [vmem:[%s275 + $0x320] sm:$0xff]
      %v404 = vld [vmem:[%s275 + $0x328] sm:$0xff]
      %v405 = vld [vmem:[%s275 + $0x330] sm:$0xff]
      %v406 = vld [vmem:[%s275 + $0x338] sm:$0xff]
      %v407 = vld [vmem:[%s275 + $0x340] sm:$0xff]
      %v408 = vld [vmem:[%s275 + $0x348] sm:$0xff]
      %v409 = vld [vmem:[%s275 + $0x350] sm:$0xff]
      %v410 = vld [vmem:[%s275 + $0x358] sm:$0xff]
      %v411 = vld [vmem:[%s2] sm:$0xff]
      %413 = vset.pattern.permute.xlu0 0
      %414 = vperm.xlu0 %413, %v411
      %v415 = vpop.permute.xlu0 %414
      %vm417 = vcmask 719872
      %v419 = vsel %vm417, %v302, 0
      %421 = vmatprep.subr.mxu0 %v364
      %422 = vmatpush1.msra.mxu0 %v363
      %423 = vmatprep.subr.mxu0 %v360
      %424 = vmatpush1.msra.mxu0 %v359
      %425 = vmatprep.subr.mxu0 %v356
      %426 = vmatpush1.msra.mxu0 %v355
      %427 = vmatprep.subr.mxu0 %v352
      %428 = vmatpush1.msra.mxu0 %v351
      %429 = vmatprep.subr.mxu0 %v348
      %430 = vmatpush1.msra.mxu0 %v347
      %431 = vmatprep.subr.mxu0 %v344
      %432 = vmatpush1.msra.mxu0 %v343
      %433 = vmatprep.subr.mxu0 %v340
      %434 = vmatpush1.msra.mxu0 %v339
      %435 = vmatprep.subr.mxu0 %v336
      %436 = vmatpush1.msra.mxu0 %v335
      %437 = vmatprep.subr.mxu0 %v332
      %438 = vmatpush1.msra.mxu0 %v331
      %439 = vmatprep.subr.mxu0 %v328
      %440 = vmatpush1.msra.mxu0 %v327
      %441 = vmatprep.subr.mxu0 %v324
      %442 = vmatpush1.msra.mxu0 %v323
      %443 = vmatprep.subr.mxu0 %v320
      %444 = vmatpush1.msra.mxu0 %v319
      %445 = vmatprep.subr.mxu0 %v316
      %446 = vmatpush1.msra.mxu0 %v315
      %447 = vmatprep.subr.mxu0 %v312
      %448 = vmatpush1.msra.mxu0 %v311
      %449 = vmatprep.subr.mxu0 %v308
      %450 = vmatpush1.msra.mxu0 %v307
      %451 = vmatprep.subr.mxu0 %v304
      %452 = vmatpush1.msra.mxu0 %v303
      %453 = vmatprep.subr.mxu0 0.0
      %454 = vmatpush2.msra.mxu0 0.0
      %455 = vmatprep.subr.mxu0 0.0
      %456 = vmatpush2.msra.mxu0 0.0
      %457 = vmatprep.subr.mxu0 0.0
      %458 = vmatpush2.msra.mxu0 0.0
      %459 = vmatprep.subr.mxu0 0.0
      %460 = vmatpush2.msra.mxu0 0.0
      %461 = vmatprep.subr.mxu0 0.0
      %462 = vmatpush2.msra.mxu0 0.0
      %463 = vmatprep.subr.mxu0 %v408
      %464 = vmatpush2.msra.mxu0 %v407
      %465 = vmatprep.subr.mxu0 %v404
      %466 = vmatpush2.msra.mxu0 %v403
      %467 = vmatprep.subr.mxu0 %v400
      %468 = vmatpush2.msra.mxu0 %v399
      %469 = vmatprep.subr.mxu0 %v396
      %470 = vmatpush2.msra.mxu0 %v395
      %471 = vmatprep.subr.mxu0 %v392
      %472 = vmatpush2.msra.mxu0 %v391
      %473 = vmatprep.subr.mxu0 %v388
      %474 = vmatpush2.msra.mxu0 %v387
      %475 = vmatprep.subr.mxu0 %v384
      %476 = vmatpush2.msra.mxu0 %v383
      %477 = vmatprep.subr.mxu0 %v380
      %478 = vmatpush2.msra.mxu0 %v379
      %479 = vmatprep.subr.mxu0 %v376
      %480 = vmatpush2.msra.mxu0 %v375
      %481 = vmatprep.subr.mxu0 %v372
      %482 = vmatpush2.msra.mxu0 %v371
      %483 = vmatprep.subr.mxu0 %v368
      %484 = vmatpush2.msra.mxu0 %v367
      %485 = vmatprep.mubr.f32.mxu0 %v419
      %486 = vmatmul.mubr.f32.gmra.mxu0 %v301
      %v487 = vpop.f32.mrf.mxu0
      %v488 = vadd.f32 %v415, %v487
      %v489 = vpop.f32.mrf.mxu0
      %v490 = vadd.f32 %v415, %v489
      %491 = vdwg.mxu0
      %492 = vmatprep.subr.mxu0 %v366
      %493 = vmatpush1.msra.mxu0 %v365
      %494 = vmatprep.subr.mxu0 %v362
      %495 = vmatpush1.msra.mxu0 %v361
      %496 = vmatprep.subr.mxu0 %v358
      %497 = vmatpush1.msra.mxu0 %v357
      %498 = vmatprep.subr.mxu0 %v354
      %499 = vmatpush1.msra.mxu0 %v353
      %500 = vmatprep.subr.mxu0 %v350
      %501 = vmatpush1.msra.mxu0 %v349
      %502 = vmatprep.subr.mxu0 %v346
      %503 = vmatpush1.msra.mxu0 %v345
      %504 = vmatprep.subr.mxu0 %v342
      %505 = vmatpush1.msra.mxu0 %v341
      %506 = vmatprep.subr.mxu0 %v338
      %507 = vmatpush1.msra.mxu0 %v337
      %508 = vmatprep.subr.mxu0 %v334
      %509 = vmatpush1.msra.mxu0 %v333
      %510 = vmatprep.subr.mxu0 %v330
      %511 = vmatpush1.msra.mxu0 %v329
      %512 = vmatprep.subr.mxu0 %v326
      %513 = vmatpush1.msra.mxu0 %v325
      %514 = vmatprep.subr.mxu0 %v322
      %515 = vmatpush1.msra.mxu0 %v321
      %516 = vmatprep.subr.mxu0 %v318
      %517 = vmatpush1.msra.mxu0 %v317
      %518 = vmatprep.subr.mxu0 %v314
      %519 = vmatpush1.msra.mxu0 %v313
      %520 = vmatprep.subr.mxu0 %v310
      %521 = vmatpush1.msra.mxu0 %v309
      %522 = vmatprep.subr.mxu0 %v306
      %523 = vmatpush1.msra.mxu0 %v305
      %524 = vmatprep.subr.mxu0 0.0
      %525 = vmatpush2.msra.mxu0 0.0
      %526 = vmatprep.subr.mxu0 0.0
      %527 = vmatpush2.msra.mxu0 0.0
      %528 = vmatprep.subr.mxu0 0.0
      %529 = vmatpush2.msra.mxu0 0.0
      %530 = vmatprep.subr.mxu0 0.0
      %531 = vmatpush2.msra.mxu0 0.0
      %532 = vmatprep.subr.mxu0 0.0
      %533 = vmatpush2.msra.mxu0 0.0
      %534 = vmatprep.subr.mxu0 %v410
      %535 = vmatpush2.msra.mxu0 %v409
      %536 = vmatprep.subr.mxu0 %v406
      %537 = vmatpush2.msra.mxu0 %v405
      %538 = vmatprep.subr.mxu0 %v402
      %539 = vmatpush2.msra.mxu0 %v401
      %540 = vmatprep.subr.mxu0 %v398
      %541 = vmatpush2.msra.mxu0 %v397
      %542 = vmatprep.subr.mxu0 %v394
      %543 = vmatpush2.msra.mxu0 %v393
      %544 = vmatprep.subr.mxu0 %v390
      %545 = vmatpush2.msra.mxu0 %v389
      %546 = vmatprep.subr.mxu0 %v386
      %547 = vmatpush2.msra.mxu0 %v385
      %548 = vmatprep.subr.mxu0 %v382
      %549 = vmatpush2.msra.mxu0 %v381
      %550 = vmatprep.subr.mxu0 %v378
      %551 = vmatpush2.msra.mxu0 %v377
      %552 = vmatprep.subr.mxu0 %v374
      %553 = vmatpush2.msra.mxu0 %v373
      %554 = vmatprep.subr.mxu0 %v370
      %555 = vmatpush2.msra.mxu0 %v369
      %556 = vmatprep.mubr.f32.mxu0 %v419
      %557 = vmatmul.mubr.f32.gmra.mxu0 %v301
      %v558 = vpop.f32.mrf.mxu0
      %v559 = vadd.f32 %v415, %v558
      %v560 = vpop.f32.mrf.mxu0
      %v561 = vadd.f32 %v415, %v560
      %562 = vdwg.mxu0
      %563 = vst [vmem:[%s285] sm:$0xff] %v488
      %564 = vst [vmem:[%s285 + $0x8] sm:$0xff] %v490
      %565 = vst [vmem:[%s285 + $0x10] sm:$0xff] %v559
      %566 = vst [vmem:[%s285 + $0x18] sm:$0xff] %v561
      %v567 = vadd.f32 %v488, %v490
      %v568 = vadd.f32 %v567, %v559
      %v569 = vadd.f32 %v568, %v561
      %570 = vadd.xlane.f32.xlu0 %v569
      %v571 = vpop.xlane.xlu0 %570
      %vm572 = vcmask 7168
      %573 = vst.msk [vmem:[%s293] sm:$0xff] %vm572, %v571
      %v574 = vmul.f32 %v488, %v488
      %v575 = vmul.f32 %v490, %v490
      %v576 = vmul.f32 %v559, %v559
      %v577 = vmul.f32 %v561, %v561
      %v578 = vadd.f32 %v574, %v575
      %v579 = vadd.f32 %v578, %v576
      %v580 = vadd.f32 %v579, %v577
      %581 = vadd.xlane.f32.xlu0 %v580
      %v582 = vpop.xlane.xlu0 %581
      %583 = vst.msk [vmem:[%s300] sm:$0xff] %vm572, %v582
      %s584 = smul.u32 4, %s22
      %p585 = scmp.lt.s32.totalorder %s21, 1
      %s586 = scalar_select %p585, %s21, 1
      %p587 = scmp.lt.s32.totalorder %s584, 3
      %s588 = scalar_select %p587, %s584, 3
      %s589 = smul.addr %s586, 4
      %s590 = sadd.s32 %s588, %s589
      %s591 = smul.addr %s590, 8
      %s592 = scalar_lea.vmem %s3, %s591
      %p593 = scmp.lt.s32.totalorder %s21, 1
      %s594 = scalar_select %p593, %s21, 1
      %p595 = scmp.lt.s32.totalorder %s22, 0
      %s596 = scalar_select %p595, %s22, 0
      %s597 = sadd.s32 %s596, %s594
      %s598 = smul.addr %s597, 8
      %s599 = scalar_lea.vmem %s4, %s598
      %p600 = scmp.lt.s32.totalorder %s21, 1
      %s601 = scalar_select %p600, %s21, 1
      %p602 = scmp.lt.s32.totalorder %s22, 0
      %s603 = scalar_select %p602, %s22, 0
      %s604 = sadd.s32 %s603, %s601
      %s605 = smul.addr %s604, 8
      %s606 = scalar_lea.vmem %s5, %s605
      // Predicated region
      $region33: #{resnet_block3d_forward.7} parent=31 // pred_check
        %p607 = pneg %p119
      $region34: #{resnet_block3d_forward.7} parent=31 // pred_check_branch
        %609 = sbr.rel (%p607) target = $region36
      $region35: #{resnet_block3d_forward.7} parent=31 // pred_region
        %s610 = smul.u32 4, %s22
      $region36: #{resnet_block3d_forward.7} parent=31 // pred_fallthru
        _
      // Predicated region
      $region37: #{resnet_block3d_forward.7} parent=31 // pred_check
        %p611 = pneg %p147
      $region38: #{resnet_block3d_forward.7} parent=31 // pred_check_branch
        %613 = sbr.rel (%p611) target = $region40
      $region39: #{resnet_block3d_forward.7} parent=31 // pred_region
        _
      $region40: #{resnet_block3d_forward.7} parent=31 // pred_fallthru
        _
      // Predicated region
      $region41: #{resnet_block3d_forward.7} parent=31 // pred_check
        %p614 = pneg %p175
      $region42: #{resnet_block3d_forward.7} parent=31 // pred_check_branch
        %616 = sbr.rel (%p614) target = $region44
      $region43: #{resnet_block3d_forward.7} parent=31 // pred_region
        _
      $region44: #{resnet_block3d_forward.7} parent=31 // pred_fallthru
        _
    $region32: #{resnet_block3d_forward.7} parent=5 // pred_fallthru
      _
    %p617 = scmp.le.s32.totalorder 2, %s12
    // Predicated region
    $region45: #{resnet_block3d_forward.7} parent=5 // pred_check
      %p618 = pneg %p617
    $region46: #{resnet_block3d_forward.7} parent=5 // pred_check_branch
      %620 = sbr.rel (%p618) target = $region48
    $region47: #{resnet_block3d_forward.7} parent=5 // pred_region
      %s621 = ssub.s32 %s12, 2
      // Predicated region
      $region49: #{resnet_block3d_forward.7} parent=47 // pred_check
        %p622 = pneg %p125
      $region50: #{resnet_block3d_forward.7} parent=47 // pred_check_branch
        %624 = sbr.rel (%p622) target = $region52
      $region51: #{resnet_block3d_forward.7} parent=47 // pred_region
        %s625 = smul.u32 4, %s24
        %p626 = scmp.lt.s32.totalorder %s23, 1
        %s627 = scalar_select %p626, %s23, 1
        %p628 = scmp.lt.s32.totalorder %s625, 3
        %s629 = scalar_select %p628, %s625, 3
        %s630 = smul.addr %s627, 4
        %s631 = sadd.s32 %s629, %s630
        %s632 = smul.addr %s631, 8
        %s633 = scalar_lea.vmem %s3, %s632
      $region52: #{resnet_block3d_forward.7} parent=47 // pred_fallthru
        _
      // Predicated region
      $region53: #{resnet_block3d_forward.7} parent=47 // pred_check
        %p634 = pneg %p153
      $region54: #{resnet_block3d_forward.7} parent=47 // pred_check_branch
        %636 = sbr.rel (%p634) target = $region56
      $region55: #{resnet_block3d_forward.7} parent=47 // pred_region
        %p637 = scmp.lt.s32.totalorder %s23, 1
        %s638 = scalar_select %p637, %s23, 1
        %p639 = scmp.lt.s32.totalorder %s24, 0
        %s640 = scalar_select %p639, %s24, 0
        %s641 = sadd.s32 %s640, %s638
        %s642 = smul.addr %s641, 8
        %s643 = scalar_lea.vmem %s4, %s642
      $region56: #{resnet_block3d_forward.7} parent=47 // pred_fallthru
        _
      // Predicated region
      $region57: #{resnet_block3d_forward.7} parent=47 // pred_check
        %p644 = pneg %p181
      $region58: #{resnet_block3d_forward.7} parent=47 // pred_check_branch
        %646 = sbr.rel (%p644) target = $region60
      $region59: #{resnet_block3d_forward.7} parent=47 // pred_region
        %p647 = scmp.lt.s32.totalorder %s23, 1
        %s648 = scalar_select %p647, %s23, 1
        %p649 = scmp.lt.s32.totalorder %s24, 0
        %s650 = scalar_select %p649, %s24, 0
        %s651 = sadd.s32 %s650, %s648
        %s652 = smul.addr %s651, 8
        %s653 = scalar_lea.vmem %s5, %s652
      $region60: #{resnet_block3d_forward.7} parent=47 // pred_fallthru
        _
    $region48: #{resnet_block3d_forward.7} parent=5 // pred_fallthru
      _
  $region6: #{resnet_block3d_forward.7} parent=0 // loop_footer
    %s16 = sadd.s32 1, %s12
  $region7: #{resnet_block3d_forward.7} parent=0 // loop_footer_branch
    %11 = sbr.rel target = $region3
  $region8: #{resnet_block3d_forward.7} parent=0 // loop_exit
    _

</llo_original>
